<compile_context>
chip_gen: v7x
topology: tpu7x:2x2x1
jax: 0.10.0
libtpu: 0.0.40
codegen_flags: <defaults>
</compile_context>

<pallas_src>
import jax
import jax.numpy as jnp
from jax import lax
from jax.experimental import pallas as pl
from jax.experimental.pallas import tpu as pltpu

LANE = 128


def make_divisible(v, divisor=8, min_value=None):
    min_value = min_value or divisor
    new_v = max(min_value, int(v + divisor / 2) // divisor * divisor)
    if new_v < 0.9 * v:
        new_v += divisor
    return new_v


def _round_up(x, m):
    return (x + m - 1) // m * m


# ----------------------------------------------------------------------------
# Pallas kernel
# ----------------------------------------------------------------------------
def bottleneck_kernel(x_ref, w1_ref, b1_ref, w3_ref, b3_ref, w5_ref, b5_ref,
                      o_ref, pad_ref, col_ref):
    """
    x_ref  : (1, H, W, Cin)    bf16  full image (resident across row blocks)
    w1_ref : (Cin, Cm)         bf16  conv1 1x1 (BN folded)
    b1_ref : (1, Cm)           f32
    w3_ref : (9*Cm, Cm)        bf16  conv2 3x3 reshaped to im2col layout
    b3_ref : (1, Cm)           f32
    w5_ref : (Cm, Cout)        bf16  conv3 1x1 (BN folded, no act)
    b5_ref : (1, Cout)         f32
    o_ref  : (1, TH, W, Cout)  f32   one row block of the output
    pad_ref: (H+2, W+2, Cm)    f32   persistent zero-haloed conv1 output
    col_ref: (TH*W, 9*Cm)      bf16  im2col buffer for the 3x3 conv
    """
    _, H, W, _ = x_ref.shape
    Cm = w1_ref.shape[1]
    TH = o_ref.shape[1]
    Cout = o_ref.shape[3]
    r = pl.program_id(1)

    # --- per-batch stage (row block 0): halo zero + conv1 over full image ---
    @pl.when(r == 0)
    def _():
        # Zero only the 1-pixel halo strips; the interior is fully overwritten
        # by conv1 below (no redundant full-buffer zeroing).
        zrow = jnp.zeros((1, W + 2, Cm), jnp.float32)
        pad_ref[pl.ds(0, 1), :, :] = zrow
        pad_ref[pl.ds(H + 1, 1), :, :] = zrow
        zcol = jnp.zeros((H + 2, 1, Cm), jnp.float32)
        pad_ref[:, pl.ds(0, 1), :] = zcol
        pad_ref[:, pl.ds(W + 1, 1), :] = zcol

        # conv1 1x1 + folded BN + ReLU (whole image, one MXU matmul).
        x = x_ref[0].reshape(H * W, x_ref.shape[3])
        y1 = jnp.dot(x, w1_ref[...], preferred_element_type=jnp.float32)
        y1 = jnp.maximum(y1 + b1_ref[...], 0.0)
        pad_ref[pl.ds(1, H), pl.ds(1, W), :] = y1.reshape(H, W, Cm)

    # --- per-row-block stage -------------------------------------------------
    row0 = pl.multiple_of(r * TH, TH)

    # im2col: pack the 9 shifted windows into one (TH*W, 9*Cm) bf16 buffer.
    for dh in range(3):
        for dw in range(3):
            tap = dh * 3 + dw
            win = pad_ref[pl.ds(row0 + dh, TH), pl.ds(dw, W), :]
            col_ref[:, pl.ds(tap * Cm, Cm)] = (
                win.reshape(TH * W, Cm).astype(col_ref.dtype))

    # conv2 3x3 as ONE deep-K matmul (K = 9*Cm), + folded BN + ReLU.
    y2 = jnp.dot(col_ref[...], w3_ref[...], preferred_element_type=jnp.float32)
    y2 = jnp.maximum(y2 + b3_ref[...], 0.0)

    # conv3 1x1 + folded BN (no activation).
    y3 = jnp.dot(y2.astype(w5_ref.dtype), w5_ref[...],
                 preferred_element_type=jnp.float32) + b5_ref[...]

    # identity shortcut + final ReLU (f32).
    xr = x_ref[0, pl.ds(row0, TH), :, :].astype(jnp.float32)
    out = jnp.maximum(y3.reshape(TH, W, Cout) + xr, 0.0)
    o_ref[0] = out.astype(o_ref.dtype)


# ----------------------------------------------------------------------------
# Wrappers
# ----------------------------------------------------------------------------
def bottleneck_block_nhwc(x, w1, b1, w3, b3, w5, b5, *, tile_h=8):
    """x: (B, H, W, Cin) float.  Returns (B, H, W, Cout) float32 (NHWC)."""
    B, H, W, Cin = x.shape
    Cm = w1.shape[1]
    Cout = w5.shape[1]
    # TODO(synk): only the identity-shortcut configuration (stride=1,
    # in_chs == out_chs) is implemented; the 'avg'/'conv1x1' downsample
    # shortcut variants of the original module are not.
    assert Cin == Cout, "identity shortcut requires in_chs == out_chs"
    assert H % tile_h == 0, "H must be divisible by the row tile"

    cin_p = _round_up(Cin, LANE)
    cm_p = _round_up(Cm, LANE)
    cout_p = _round_up(Cout, LANE)

    # Lane-dense channel padding; bf16 for all MXU operands, f32 biases.
    xp = jnp.pad(x, ((0, 0), (0, 0), (0, 0), (0, cin_p - Cin))).astype(jnp.bfloat16)
    w1p = jnp.pad(w1, ((0, cin_p - Cin), (0, cm_p - Cm))).astype(jnp.bfloat16)
    b1p = jnp.pad(b1, ((0, 0), (0, cm_p - Cm))).astype(jnp.float32)
    w3p = jnp.pad(w3, ((0, 0), (0, 0), (0, cm_p - Cm), (0, cm_p - Cm)))
    w3p = w3p.reshape(9 * cm_p, cm_p).astype(jnp.bfloat16)   # im2col layout, once
    b3p = jnp.pad(b3, ((0, 0), (0, cm_p - Cm))).astype(jnp.float32)
    w5p = jnp.pad(w5, ((0, cm_p - Cm), (0, cout_p - Cout))).astype(jnp.bfloat16)
    b5p = jnp.pad(b5, ((0, 0), (0, cout_p - Cout))).astype(jnp.float32)

    TH = tile_h
    out = pl.pallas_call(
        bottleneck_kernel,
        out_shape=jax.ShapeDtypeStruct((B, H, W, cout_p), jnp.float32),
        grid=(B, H // TH),
        in_specs=[
            pl.BlockSpec((1, H, W, cin_p), lambda b, r: (b, 0, 0, 0)),
            pl.BlockSpec((cin_p, cm_p), lambda b, r: (0, 0)),
            pl.BlockSpec((1, cm_p), lambda b, r: (0, 0)),
            pl.BlockSpec((9 * cm_p, cm_p), lambda b, r: (0, 0)),
            pl.BlockSpec((1, cm_p), lambda b, r: (0, 0)),
            pl.BlockSpec((cm_p, cout_p), lambda b, r: (0, 0)),
            pl.BlockSpec((1, cout_p), lambda b, r: (0, 0)),
        ],
        out_specs=pl.BlockSpec((1, TH, W, cout_p), lambda b, r: (b, r, 0, 0)),
        scratch_shapes=[
            pltpu.VMEM((H + 2, W + 2, cm_p), jnp.float32),   # padded conv1 out
            pltpu.VMEM((TH * W, 9 * cm_p), jnp.bfloat16),    # im2col buffer
        ],
        compiler_params=pltpu.CompilerParams(
            dimension_semantics=("parallel", "arbitrary"),
            vmem_limit_bytes=32 * 1024 * 1024),
    )(xp, w1p, b1p, w3p, b3p, w5p, b5p)

    return out[..., :Cout]


def bottleneck_block(x_nchw, w1, b1, w3, b3, w5, b5):
    """PyTorch-layout wrapper: (B, Cin, H, W) -> (B, Cout, H, W).

    NOTE: in a real network keep activations NHWC end-to-end across blocks;
    the transposes here only adapt to the PyTorch NCHW reference layout.
    """
    x = jnp.transpose(x_nchw, (0, 2, 3, 1))
    y = bottleneck_block_nhwc(x, w1, b1, w3, b3, w5, b5)
    return jnp.transpose(y, (0, 3, 1, 2))


# ----------------------------------------------------------------------------
# Deterministic parameter construction (conv weights + folded BatchNorm)
# ----------------------------------------------------------------------------
def _folded_bn(kg, kb, km, kv, c, eps=1e-5):
    gamma = 1.0 + 0.1 * jax.random.normal(kg, (c,), jnp.float32)
    beta = 0.1 * jax.random.normal(kb, (c,), jnp.float32)
    mean = 0.1 * jax.random.normal(km, (c,), jnp.float32)
    var = jax.random.uniform(kv, (c,), jnp.float32, 0.5, 1.5)
    scale = gamma / jnp.sqrt(var + eps)
    bias = beta - mean * scale
    return scale, bias


def make_params(key, cin, cmid, cout):
    ks = jax.random.split(key, 15)
    # conv1 1x1: (cin, cmid)
    w1 = 0.1 * jax.random.normal(ks[0], (cin, cmid), jnp.float32)
    s1, b1 = _folded_bn(ks[1], ks[2], ks[3], ks[4], cmid)
    w1 = w1 * s1[None, :]
    # conv2 3x3: HWIO (3, 3, cmid, cmid)
    w3 = 0.1 * jax.random.normal(ks[5], (3, 3, cmid, cmid), jnp.float32)
    s3, b3 = _folded_bn(ks[6], ks[7], ks[8], ks[9], cmid)
    w3 = w3 * s3[None, None, None, :]
    # conv3 1x1: (cmid, cout), BN only (apply_act=False)
    w5 = 0.1 * jax.random.normal(ks[10], (cmid, cout), jnp.float32)
    s5, b5 = _folded_bn(ks[11], ks[12], ks[13], ks[14], cout)
    w5 = w5 * s5[None, :]
    return (w1, b1.reshape(1, -1), w3, b3.reshape(1, -1),
            w5, b5.reshape(1, -1))


# ----------------------------------------------------------------------------
# Pure-JAX reference (mirrors the kernel's bf16 quantization of MXU inputs).
# ----------------------------------------------------------------------------
def ref_forward(x_nchw, w1, b1, w3, b3, w5, b5):
    bf16, f32 = jnp.bfloat16, jnp.float32
    x = jnp.transpose(x_nchw, (0, 2, 3, 1)).astype(bf16)
    y = jnp.einsum('bhwc,cd->bhwd', x, w1.astype(bf16),
                   preferred_element_type=f32) + b1
    y = jnp.maximum(y, 0.0).astype(bf16)
    y = lax.conv_general_dilated(
        y, w3.astype(bf16), window_strides=(1, 1), padding='SAME',
        dimension_numbers=('NHWC', 'HWIO', 'NHWC'),
        preferred_element_type=f32) + b3
    y = jnp.maximum(y, 0.0).astype(bf16)
    y = jnp.einsum('bhwc,cd->bhwd', y, w5.astype(bf16),
                   preferred_element_type=f32) + b5
    y = jnp.maximum(y + x.astype(f32), 0.0)
    return jnp.transpose(y, (0, 3, 1, 2))


if __name__ == "__main__":
    B, Cin, H, W = 2, 32, 16, 16
    Cout = Cin                                   # identity shortcut path
    Cmid = make_divisible(Cout * 1.0)            # bottle_ratio = 1.0 -> 32

    key = jax.random.PRNGKey(0)
    kx, kp = jax.random.split(key)
    x = jax.random.normal(kx, (B, Cin, H, W), jnp.float32)
    params = make_params(kp, Cin, Cmid, Cout)

    out = jax.block_until_ready(bottleneck_block(x, *params))
    ref = jax.block_until_ready(ref_forward(x, *params))

    assert out.shape == (B, Cout, H, W)
    err = jnp.max(jnp.abs(out - ref))
    assert jnp.allclose(out, ref, atol=1e-2, rtol=1e-2), f"max abs err {err}"

    print("KERNEL_OK")
</pallas_src>

<mosaic_0001>
module attributes {stable_mosaic.version = 11 : i64} {
  func.func @bottleneck_kernel(%arg0: i32, %arg1: i32, %arg2: memref<1x16x16x128xbf16, #tpu.memory_space<vmem>>, %arg3: memref<128x128xbf16, #tpu.memory_space<vmem>>, %arg4: memref<1x128xf32, #tpu.memory_space<vmem>>, %arg5: memref<1152x128xbf16, #tpu.memory_space<vmem>>, %arg6: memref<1x128xf32, #tpu.memory_space<vmem>>, %arg7: memref<128x128xbf16, #tpu.memory_space<vmem>>, %arg8: memref<1x128xf32, #tpu.memory_space<vmem>>, %arg9: memref<1x8x16x128xf32, #tpu.memory_space<vmem>>, %arg10: memref<18x18x128xf32, #tpu.memory_space<vmem>>, %arg11: memref<128x1152xbf16, #tpu.memory_space<vmem>>) attributes {dimension_semantics = [#tpu.dimension_semantics<parallel>, #tpu.dimension_semantics<arbitrary>], iteration_bounds = array<i64: 2, 2>, scalar_prefetch = 0 : i64, scratch_operands = 2 : i64, tpu.core_type = #tpu.core_type<tc>, window_params = [{transform_indices = @transform_0, window_bounds = array<i64: 1, 16, 16, 128>}, {pipeline_mode = #tpu.pipeline_mode<synchronous>, transform_indices = @transform_1, window_bounds = array<i64: 128, 128>}, {pipeline_mode = #tpu.pipeline_mode<synchronous>, transform_indices = @transform_2, window_bounds = array<i64: 1, 128>}, {pipeline_mode = #tpu.pipeline_mode<synchronous>, transform_indices = @transform_3, window_bounds = array<i64: 1152, 128>}, {pipeline_mode = #tpu.pipeline_mode<synchronous>, transform_indices = @transform_4, window_bounds = array<i64: 1, 128>}, {pipeline_mode = #tpu.pipeline_mode<synchronous>, transform_indices = @transform_5, window_bounds = array<i64: 128, 128>}, {pipeline_mode = #tpu.pipeline_mode<synchronous>, transform_indices = @transform_6, window_bounds = array<i64: 1, 128>}, {transform_indices = @transform_7, window_bounds = array<i64: 1, 8, 16, 128>}]} {
    %c0_i32 = arith.constant 0 : i32
    %0 = arith.cmpi eq, %arg1, %c0_i32 : i32
    %1 = arith.extui %0 : i1 to i32
    %c0_i32_0 = arith.constant 0 : i32
    %2 = arith.cmpi ne, %1, %c0_i32_0 : i32
    scf.if %2 {
      %cst_53 = arith.constant 0.000000e+00 : f32
      %84 = vector.broadcast %cst_53 : f32 to vector<1x18x128xf32>
      %c0_54 = arith.constant 0 : index
      %c0_55 = arith.constant 0 : index
      %c0_56 = arith.constant 0 : index
      %85 = vector.load %arg10[%c0_54, %c0_55, %c0_56] : memref<18x18x128xf32, #tpu.memory_space<vmem>>, vector<1x18x128xf32>
      tpu.vector_store %arg10[%c0_54, %c0_55, %c0_56], %84 {strides = array<i32>} : memref<18x18x128xf32, #tpu.memory_space<vmem>>, vector<1x18x128xf32>,
      %c17 = arith.constant 17 : index
      %c0_57 = arith.constant 0 : index
      %c0_58 = arith.constant 0 : index
      %86 = vector.load %arg10[%c17, %c0_57, %c0_58] : memref<18x18x128xf32, #tpu.memory_space<vmem>>, vector<1x18x128xf32>
      tpu.vector_store %arg10[%c17, %c0_57, %c0_58], %84 {strides = array<i32>} : memref<18x18x128xf32, #tpu.memory_space<vmem>>, vector<1x18x128xf32>,
      %cst_59 = arith.constant 0.000000e+00 : f32
      %87 = vector.broadcast %cst_59 : f32 to vector<18x1x128xf32>
      %c0_60 = arith.constant 0 : index
      %c0_61 = arith.constant 0 : index
      %c0_62 = arith.constant 0 : index
      %88 = vector.load %arg10[%c0_60, %c0_61, %c0_62] : memref<18x18x128xf32, #tpu.memory_space<vmem>>, vector<18x1x128xf32>
      tpu.vector_store %arg10[%c0_60, %c0_61, %c0_62], %87 {strides = array<i32>} : memref<18x18x128xf32, #tpu.memory_space<vmem>>, vector<18x1x128xf32>,
      %c0_63 = arith.constant 0 : index
      %c17_64 = arith.constant 17 : index
      %c0_65 = arith.constant 0 : index
      %89 = vector.load %arg10[%c0_63, %c17_64, %c0_65] : memref<18x18x128xf32, #tpu.memory_space<vmem>>, vector<18x1x128xf32>
      tpu.vector_store %arg10[%c0_63, %c17_64, %c0_65], %87 {strides = array<i32>} : memref<18x18x128xf32, #tpu.memory_space<vmem>>, vector<18x1x128xf32>,
      %c0_66 = arith.constant 0 : index
      %c0_67 = arith.constant 0 : index
      %c0_68 = arith.constant 0 : index
      %c0_69 = arith.constant 0 : index
      %90 = vector.load %arg2[%c0_66, %c0_67, %c0_68, %c0_69] : memref<1x16x16x128xbf16, #tpu.memory_space<vmem>>, vector<1x16x16x128xbf16>
      %91 = vector.shape_cast %90 : vector<1x16x16x128xbf16> to vector<16x16x128xbf16>
      %92 = vector.shape_cast %91 : vector<16x16x128xbf16> to vector<256x128xbf16>
      %c0_70 = arith.constant 0 : index
      %c0_71 = arith.constant 0 : index
      %93 = vector.load %arg3[%c0_70, %c0_71] : memref<128x128xbf16, #tpu.memory_space<vmem>>, vector<128x128xbf16>
      %cst_72 = arith.constant dense<0.000000e+00> : vector<256x128xf32>
      %94 = tpu.matmul %92, %93, %cst_72 {dimension_numbers = #tpu.dot_dimension_numbers<[1], [0], [0], [1], [0, 0, 1, 1], [], []>} : vector<256x128xbf16>, vector<128x128xbf16>, vector<256x128xf32> -> vector<256x128xf32>
      %c0_73 = arith.constant 0 : index
      %c0_74 = arith.constant 0 : index
      %95 = vector.load %arg4[%c0_73, %c0_74] : memref<1x128xf32, #tpu.memory_space<vmem>>, vector<1x128xf32>
      %96 = vector.broadcast %95 : vector<1x128xf32> to vector<256x128xf32>
      %97 = arith.addf %94, %96 : vector<256x128xf32>
      %cst_75 = arith.constant 0.000000e+00 : f32
      %98 = vector.broadcast %cst_75 : f32 to vector<256x128xf32>
      %99 = arith.maximumf %97, %98 : vector<256x128xf32>
      %100 = vector.shape_cast %99 : vector<256x128xf32> to vector<16x16x128xf32>
      %c1_76 = arith.constant 1 : index
      %c1_77 = arith.constant 1 : index
      %c0_78 = arith.constant 0 : index
      %101 = vector.load %arg10[%c1_76, %c1_77, %c0_78] : memref<18x18x128xf32, #tpu.memory_space<vmem>>, vector<16x16x128xf32>
      tpu.vector_store %arg10[%c1_76, %c1_77, %c0_78], %100 {strides = array<i32>} : memref<18x18x128xf32, #tpu.memory_space<vmem>>, vector<16x16x128xf32>,
    } else {
    }
    %c8_i32 = arith.constant 8 : i32
    %3 = arith.muli %arg1, %c8_i32 : i32
    %4 = tpu.assume_multiple %3, 8 : i32
    %c0_i32_1 = arith.constant 0 : i32
    %5 = arith.addi %4, %c0_i32_1 : i32
    %6 = arith.index_cast %5 : i32 to index
    %c0 = arith.constant 0 : index
    %c0_2 = arith.constant 0 : index
    %7 = vector.load %arg10[%6, %c0, %c0_2] : memref<18x18x128xf32, #tpu.memory_space<vmem>>, vector<8x16x128xf32>
    %8 = vector.shape_cast %7 : vector<8x16x128xf32> to vector<128x128xf32>
    %9 = arith.truncf %8 : vector<128x128xf32> to vector<128x128xbf16>
    %c0_3 = arith.constant 0 : index
    %c0_4 = arith.constant 0 : index
    %10 = vector.load %arg11[%c0_3, %c0_4] : memref<128x1152xbf16, #tpu.memory_space<vmem>>, vector<128x128xbf16>
    tpu.vector_store %arg11[%c0_3, %c0_4], %9 {strides = array<i32>} : memref<128x1152xbf16, #tpu.memory_space<vmem>>, vector<128x128xbf16>,
    %c0_i32_5 = arith.constant 0 : i32
    %11 = arith.addi %4, %c0_i32_5 : i32
    %12 = arith.index_cast %11 : i32 to index
    %c1 = arith.constant 1 : index
    %c0_6 = arith.constant 0 : index
    %13 = vector.load %arg10[%12, %c1, %c0_6] : memref<18x18x128xf32, #tpu.memory_space<vmem>>, vector<8x16x128xf32>
    %14 = vector.shape_cast %13 : vector<8x16x128xf32> to vector<128x128xf32>
    %15 = arith.truncf %14 : vector<128x128xf32> to vector<128x128xbf16>
    %c0_7 = arith.constant 0 : index
    %c128 = arith.constant 128 : index
    %16 = vector.load %arg11[%c0_7, %c128] : memref<128x1152xbf16, #tpu.memory_space<vmem>>, vector<128x128xbf16>
    tpu.vector_store %arg11[%c0_7, %c128], %15 {strides = array<i32>} : memref<128x1152xbf16, #tpu.memory_space<vmem>>, vector<128x128xbf16>,
    %c0_i32_8 = arith.constant 0 : i32
    %17 = arith.addi %4, %c0_i32_8 : i32
    %18 = arith.index_cast %17 : i32 to index
    %c2 = arith.constant 2 : index
    %c0_9 = arith.constant 0 : index
    %19 = vector.load %arg10[%18, %c2, %c0_9] : memref<18x18x128xf32, #tpu.memory_space<vmem>>, vector<8x16x128xf32>
    %20 = vector.shape_cast %19 : vector<8x16x128xf32> to vector<128x128xf32>
    %21 = arith.truncf %20 : vector<128x128xf32> to vector<128x128xbf16>
    %c0_10 = arith.constant 0 : index
    %c256 = arith.constant 256 : index
    %22 = vector.load %arg11[%c0_10, %c256] : memref<128x1152xbf16, #tpu.memory_space<vmem>>, vector<128x128xbf16>
    tpu.vector_store %arg11[%c0_10, %c256], %21 {strides = array<i32>} : memref<128x1152xbf16, #tpu.memory_space<vmem>>, vector<128x128xbf16>,
    %c1_i32 = arith.constant 1 : i32
    %23 = arith.addi %4, %c1_i32 : i32
    %24 = arith.index_cast %23 : i32 to index
    %c0_11 = arith.constant 0 : index
    %c0_12 = arith.constant 0 : index
    %25 = vector.load %arg10[%24, %c0_11, %c0_12] : memref<18x18x128xf32, #tpu.memory_space<vmem>>, vector<8x16x128xf32>
    %26 = vector.shape_cast %25 : vector<8x16x128xf32> to vector<128x128xf32>
    %27 = arith.truncf %26 : vector<128x128xf32> to vector<128x128xbf16>
    %c0_13 = arith.constant 0 : index
    %c384 = arith.constant 384 : index
    %28 = vector.load %arg11[%c0_13, %c384] : memref<128x1152xbf16, #tpu.memory_space<vmem>>, vector<128x128xbf16>
    tpu.vector_store %arg11[%c0_13, %c384], %27 {strides = array<i32>} : memref<128x1152xbf16, #tpu.memory_space<vmem>>, vector<128x128xbf16>,
    %c1_i32_14 = arith.constant 1 : i32
    %29 = arith.addi %4, %c1_i32_14 : i32
    %30 = arith.index_cast %29 : i32 to index
    %c1_15 = arith.constant 1 : index
    %c0_16 = arith.constant 0 : index
    %31 = vector.load %arg10[%30, %c1_15, %c0_16] : memref<18x18x128xf32, #tpu.memory_space<vmem>>, vector<8x16x128xf32>
    %32 = vector.shape_cast %31 : vector<8x16x128xf32> to vector<128x128xf32>
    %33 = arith.truncf %32 : vector<128x128xf32> to vector<128x128xbf16>
    %c0_17 = arith.constant 0 : index
    %c512 = arith.constant 512 : index
    %34 = vector.load %arg11[%c0_17, %c512] : memref<128x1152xbf16, #tpu.memory_space<vmem>>, vector<128x128xbf16>
    tpu.vector_store %arg11[%c0_17, %c512], %33 {strides = array<i32>} : memref<128x1152xbf16, #tpu.memory_space<vmem>>, vector<128x128xbf16>,
    %c1_i32_18 = arith.constant 1 : i32
    %35 = arith.addi %4, %c1_i32_18 : i32
    %36 = arith.index_cast %35 : i32 to index
    %c2_19 = arith.constant 2 : index
    %c0_20 = arith.constant 0 : index
    %37 = vector.load %arg10[%36, %c2_19, %c0_20] : memref<18x18x128xf32, #tpu.memory_space<vmem>>, vector<8x16x128xf32>
    %38 = vector.shape_cast %37 : vector<8x16x128xf32> to vector<128x128xf32>
    %39 = arith.truncf %38 : vector<128x128xf32> to vector<128x128xbf16>
    %c0_21 = arith.constant 0 : index
    %c640 = arith.constant 640 : index
    %40 = vector.load %arg11[%c0_21, %c640] : memref<128x1152xbf16, #tpu.memory_space<vmem>>, vector<128x128xbf16>
    tpu.vector_store %arg11[%c0_21, %c640], %39 {strides = array<i32>} : memref<128x1152xbf16, #tpu.memory_space<vmem>>, vector<128x128xbf16>,
    %c2_i32 = arith.constant 2 : i32
    %41 = arith.addi %4, %c2_i32 : i32
    %42 = arith.index_cast %41 : i32 to index
    %c0_22 = arith.constant 0 : index
    %c0_23 = arith.constant 0 : index
    %43 = vector.load %arg10[%42, %c0_22, %c0_23] : memref<18x18x128xf32, #tpu.memory_space<vmem>>, vector<8x16x128xf32>
    %44 = vector.shape_cast %43 : vector<8x16x128xf32> to vector<128x128xf32>
    %45 = arith.truncf %44 : vector<128x128xf32> to vector<128x128xbf16>
    %c0_24 = arith.constant 0 : index
    %c768 = arith.constant 768 : index
    %46 = vector.load %arg11[%c0_24, %c768] : memref<128x1152xbf16, #tpu.memory_space<vmem>>, vector<128x128xbf16>
    tpu.vector_store %arg11[%c0_24, %c768], %45 {strides = array<i32>} : memref<128x1152xbf16, #tpu.memory_space<vmem>>, vector<128x128xbf16>,
    %c2_i32_25 = arith.constant 2 : i32
    %47 = arith.addi %4, %c2_i32_25 : i32
    %48 = arith.index_cast %47 : i32 to index
    %c1_26 = arith.constant 1 : index
    %c0_27 = arith.constant 0 : index
    %49 = vector.load %arg10[%48, %c1_26, %c0_27] : memref<18x18x128xf32, #tpu.memory_space<vmem>>, vector<8x16x128xf32>
    %50 = vector.shape_cast %49 : vector<8x16x128xf32> to vector<128x128xf32>
    %51 = arith.truncf %50 : vector<128x128xf32> to vector<128x128xbf16>
    %c0_28 = arith.constant 0 : index
    %c896 = arith.constant 896 : index
    %52 = vector.load %arg11[%c0_28, %c896] : memref<128x1152xbf16, #tpu.memory_space<vmem>>, vector<128x128xbf16>
    tpu.vector_store %arg11[%c0_28, %c896], %51 {strides = array<i32>} : memref<128x1152xbf16, #tpu.memory_space<vmem>>, vector<128x128xbf16>,
    %c2_i32_29 = arith.constant 2 : i32
    %53 = arith.addi %4, %c2_i32_29 : i32
    %54 = arith.index_cast %53 : i32 to index
    %c2_30 = arith.constant 2 : index
    %c0_31 = arith.constant 0 : index
    %55 = vector.load %arg10[%54, %c2_30, %c0_31] : memref<18x18x128xf32, #tpu.memory_space<vmem>>, vector<8x16x128xf32>
    %56 = vector.shape_cast %55 : vector<8x16x128xf32> to vector<128x128xf32>
    %57 = arith.truncf %56 : vector<128x128xf32> to vector<128x128xbf16>
    %c0_32 = arith.constant 0 : index
    %c1024 = arith.constant 1024 : index
    %58 = vector.load %arg11[%c0_32, %c1024] : memref<128x1152xbf16, #tpu.memory_space<vmem>>, vector<128x128xbf16>
    tpu.vector_store %arg11[%c0_32, %c1024], %57 {strides = array<i32>} : memref<128x1152xbf16, #tpu.memory_space<vmem>>, vector<128x128xbf16>,
    %c0_33 = arith.constant 0 : index
    %c0_34 = arith.constant 0 : index
    %59 = vector.load %arg11[%c0_33, %c0_34] : memref<128x1152xbf16, #tpu.memory_space<vmem>>, vector<128x1152xbf16>
    %c0_35 = arith.constant 0 : index
    %c0_36 = arith.constant 0 : index
    %60 = vector.load %arg5[%c0_35, %c0_36] : memref<1152x128xbf16, #tpu.memory_space<vmem>>, vector<1152x128xbf16>
    %cst = arith.constant dense<0.000000e+00> : vector<128x128xf32>
    %61 = tpu.matmul %59, %60, %cst {dimension_numbers = #tpu.dot_dimension_numbers<[1], [0], [0], [1], [0, 0, 1, 1], [], []>} : vector<128x1152xbf16>, vector<1152x128xbf16>, vector<128x128xf32> -> vector<128x128xf32>
    %c0_37 = arith.constant 0 : index
    %c0_38 = arith.constant 0 : index
    %62 = vector.load %arg6[%c0_37, %c0_38] : memref<1x128xf32, #tpu.memory_space<vmem>>, vector<1x128xf32>
    %63 = vector.broadcast %62 : vector<1x128xf32> to vector<128x128xf32>
    %64 = arith.addf %61, %63 : vector<128x128xf32>
    %cst_39 = arith.constant 0.000000e+00 : f32
    %65 = vector.broadcast %cst_39 : f32 to vector<128x128xf32>
    %66 = arith.maximumf %64, %65 : vector<128x128xf32>
    %67 = arith.truncf %66 : vector<128x128xf32> to vector<128x128xbf16>
    %c0_40 = arith.constant 0 : index
    %c0_41 = arith.constant 0 : index
    %68 = vector.load %arg7[%c0_40, %c0_41] : memref<128x128xbf16, #tpu.memory_space<vmem>>, vector<128x128xbf16>
    %cst_42 = arith.constant dense<0.000000e+00> : vector<128x128xf32>
    %69 = tpu.matmul %67, %68, %cst_42 {dimension_numbers = #tpu.dot_dimension_numbers<[1], [0], [0], [1], [0, 0, 1, 1], [], []>} : vector<128x128xbf16>, vector<128x128xbf16>, vector<128x128xf32> -> vector<128x128xf32>
    %c0_43 = arith.constant 0 : index
    %c0_44 = arith.constant 0 : index
    %70 = vector.load %arg8[%c0_43, %c0_44] : memref<1x128xf32, #tpu.memory_space<vmem>>, vector<1x128xf32>
    %71 = vector.broadcast %70 : vector<1x128xf32> to vector<128x128xf32>
    %72 = arith.addf %69, %71 : vector<128x128xf32>
    %c0_45 = arith.constant 0 : index
    %73 = arith.index_cast %4 : i32 to index
    %c0_46 = arith.constant 0 : index
    %c0_47 = arith.constant 0 : index
    %74 = vector.load %arg2[%c0_45, %73, %c0_46, %c0_47] : memref<1x16x16x128xbf16, #tpu.memory_space<vmem>>, vector<1x8x16x128xbf16>
    %75 = vector.shape_cast %74 : vector<1x8x16x128xbf16> to vector<8x16x128xbf16>
    %76 = arith.extf %75 : vector<8x16x128xbf16> to vector<8x16x128xf32>
    %77 = vector.shape_cast %72 : vector<128x128xf32> to vector<8x16x128xf32>
    %78 = arith.addf %77, %76 : vector<8x16x128xf32>
    %cst_48 = arith.constant 0.000000e+00 : f32
    %79 = vector.broadcast %cst_48 : f32 to vector<8x16x128xf32>
    %80 = arith.maximumf %78, %79 : vector<8x16x128xf32>
    %c0_49 = arith.constant 0 : index
    %c0_50 = arith.constant 0 : index
    %c0_51 = arith.constant 0 : index
    %c0_52 = arith.constant 0 : index
    %81 = vector.load %arg9[%c0_49, %c0_50, %c0_51, %c0_52] : memref<1x8x16x128xf32, #tpu.memory_space<vmem>>, vector<1x8x16x128xf32>
    %82 = vector.shape_cast %81 : vector<1x8x16x128xf32> to vector<8x16x128xf32>
    %83 = vector.shape_cast %80 : vector<8x16x128xf32> to vector<1x8x16x128xf32>
    tpu.vector_store %arg9[%c0_49, %c0_50, %c0_51, %c0_52], %83 {strides = array<i32>} : memref<1x8x16x128xf32, #tpu.memory_space<vmem>>, vector<1x8x16x128xf32>,
    return
  }
  func.func @transform_0(%arg0: i32, %arg1: i32) -> (i32, i32, i32, i32) {
    %c0_i32 = arith.constant 0 : i32
    %c0_i32_0 = arith.constant 0 : i32
    %c0_i32_1 = arith.constant 0 : i32
    %c0_i32_2 = arith.constant 0 : i32
    return %arg0, %c0_i32, %c0_i32_0, %c0_i32_1 : i32, i32, i32, i32
  }
  func.func @transform_1(%arg0: i32, %arg1: i32) -> (i32, i32) {
    %c0_i32 = arith.constant 0 : i32
    %c0_i32_0 = arith.constant 0 : i32
    %c0_i32_1 = arith.constant 0 : i32
    return %c0_i32, %c0_i32_0 : i32, i32
  }
  func.func @transform_2(%arg0: i32, %arg1: i32) -> (i32, i32) {
    %c0_i32 = arith.constant 0 : i32
    %c0_i32_0 = arith.constant 0 : i32
    %c0_i32_1 = arith.constant 0 : i32
    return %c0_i32, %c0_i32_0 : i32, i32
  }
  func.func @transform_3(%arg0: i32, %arg1: i32) -> (i32, i32) {
    %c0_i32 = arith.constant 0 : i32
    %c0_i32_0 = arith.constant 0 : i32
    %c0_i32_1 = arith.constant 0 : i32
    return %c0_i32, %c0_i32_0 : i32, i32
  }
  func.func @transform_4(%arg0: i32, %arg1: i32) -> (i32, i32) {
    %c0_i32 = arith.constant 0 : i32
    %c0_i32_0 = arith.constant 0 : i32
    %c0_i32_1 = arith.constant 0 : i32
    return %c0_i32, %c0_i32_0 : i32, i32
  }
  func.func @transform_5(%arg0: i32, %arg1: i32) -> (i32, i32) {
    %c0_i32 = arith.constant 0 : i32
    %c0_i32_0 = arith.constant 0 : i32
    %c0_i32_1 = arith.constant 0 : i32
    return %c0_i32, %c0_i32_0 : i32, i32
  }
  func.func @transform_6(%arg0: i32, %arg1: i32) -> (i32, i32) {
    %c0_i32 = arith.constant 0 : i32
    %c0_i32_0 = arith.constant 0 : i32
    %c0_i32_1 = arith.constant 0 : i32
    return %c0_i32, %c0_i32_0 : i32, i32
  }
  func.func @transform_7(%arg0: i32, %arg1: i32) -> (i32, i32, i32, i32) {
    %c0_i32 = arith.constant 0 : i32
    %c0_i32_0 = arith.constant 0 : i32
    %c0_i32_1 = arith.constant 0 : i32
    return %arg0, %arg1, %c0_i32, %c0_i32_0 : i32, i32, i32, i32
  }
}

</mosaic_0001>

<llo_original>
// kernel: tpu_custom_call.1
$region0: #{tpu_custom_call.1}
  #allocation0 [shape = 'u32[]', space=smem, size = 0x4, offset = 0x4, fixed_abs, tag = 'smem constant byte address 0x4 - core index']
  #allocation1 [shape = 'u32[144,128]{1,0:T(1,128)}', space=vmem, size = 0x12000, scoped, tag = 'internal scratch']
  #allocation2 [shape = 'f32[18,18,128]{2,1,0:T(8,128)}', space=vmem, size = 0x36000, scoped, tag = 'scratch operand']
  #allocation3 [shape = 'bf16[128,1152]{1,0:T(16,128)(2,1)}', space=vmem, size = 0x48000, scoped, tag = 'scratch operand']
  %s0 = inlined_call_operand.hbm [shape: bf16[2,16,16,128], index: 0, kind: input, shape index: {}]
  %s1 = inlined_call_operand.hbm [shape: bf16[128,128], index: 1, kind: input, shape index: {}]
  %s2 = inlined_call_operand.vmem [shape: f32[1,128], index: 2, kind: input, shape index: {}]
  %s3 = inlined_call_operand.hbm [shape: bf16[1152,128], index: 3, kind: input, shape index: {}]
  %s4 = inlined_call_operand.vmem [shape: f32[1,128], index: 4, kind: input, shape index: {}]
  %s5 = inlined_call_operand.hbm [shape: bf16[128,128], index: 5, kind: input, shape index: {}]
  %s6 = inlined_call_operand.vmem [shape: f32[1,128], index: 6, kind: input, shape index: {}]
  %s7 = inlined_call_operand.hbm [shape: f32[2,16,16,128], index: 7, kind: output, shape index: {}]
  %s8 = sld [smem:[#allocation0]]
  $region81: #{tpu_custom_call.1} parent=0
    _
  %s10 = ssub.s32 1, %s8
  %s11 = scalar_select 0, %s10, %s8
  $region1: #{tpu_custom_call.1} parent=0
    #allocation4 [shape = 'u8[131072]{0}', space=vmem, size = 0x20000, scoped, tag = 'input window, operand 0']
    #allocation5 [shape = 's32[2]{0}', space=sflag, size = 0x8, scoped, tag = 'scoped memory for tpu_custom_call.1']
    #allocation6 [shape = 's32[2]{0}', space=sflag, size = 0x8, scoped, tag = 'scoped memory for tpu_custom_call.1']
    #allocation7 [shape = 'u8[32768]{0}', space=vmem, size = 0x8000, scoped, tag = 'input window, operand 1, single buffered']
    #allocation8 [shape = 's32[1]{0}', space=sflag, size = 0x4, scoped, tag = 'scoped memory for tpu_custom_call.1']
    #allocation9 [shape = 'u8[294912]{0}', space=vmem, size = 0x48000, scoped, tag = 'input window, operand 3, single buffered']
    #allocation10 [shape = 'u8[32768]{0}', space=vmem, size = 0x8000, scoped, tag = 'input window, operand 5, single buffered']
    #allocation11 [shape = 's32[1]{0}', space=sflag, size = 0x4, scoped, tag = 'scoped memory for tpu_custom_call.1']
    #allocation12 [shape = 'u8[131072]{0}', space=vmem, size = 0x20000, scoped, tag = 'output window, operand 0']
    %12 = vsyncpa [#allocation5], 0
    %s13 = scalar_lea.sflag [#allocation5], 1
    %14 = vsyncpa %s13, 0
    %15 = vsyncpa [#allocation8], 0
    %16 = vsyncpa [#allocation11], 0
    %17 = vsyncpa [#allocation6], 0
    %s18 = scalar_lea.sflag [#allocation6], 1
    %19 = vsyncpa %s18, 0
    loop: start=0, step=1, limit=6
    $region2: #{tpu_custom_call.1} parent=1 // loop_pre_header
      _
    $region3: #{tpu_custom_call.1} parent=1 // loop_header
      %s21 = sphi 0, %s25
      %p22 = scmp.ge.s32.totalorder %s21, 6
      %s28 = sphi 0, %s40
      %s29 = sphi 0, %s36
      %s30 = sphi 0, %s28
      %s31 = sphi 0, %s29
      %s32 = sphi 0, %s30
      %s33 = sphi 0, %s31
      %s43 = sphi 0, %s45
      %s46 = sphi 0, %s43
      %s47 = sphi 0, %s46
      %s63 = sphi 0, %s47
      %s67 = sphi 0, %s67
      %s69 = sphi 0, %s67
      %s70 = sphi 0, %s69
      %s84 = sphi 0, %s70
      %s88 = sphi 0, %s88
      %s90 = sphi 0, %s88
      %s91 = sphi 0, %s90
      %s105 = sphi 0, %s91
      %s109 = sphi 0, %s109
      %s111 = sphi 0, %s109
      %s112 = sphi 0, %s111
      %s126 = sphi 0, %s112
      %s130 = sphi 0, %s130
      %s132 = sphi 0, %s130
      %s133 = sphi 0, %s132
      %s147 = sphi 0, %s133
      %s151 = sphi 0, %s151
      %s153 = sphi 0, %s151
      %s154 = sphi 0, %s153
      %s168 = sphi 0, %s154
      %s172 = sphi 0, %s172
      %s174 = sphi 0, %s172
      %s175 = sphi 0, %s174
      %s189 = sphi 0, %s175
      %s197 = sphi 0, %s199
      %s200 = sphi 0, %s197
      %s201 = sphi 0, %s200
      %s217 = sphi 0, %s201
    $region4: #{tpu_custom_call.1} parent=1 // loop_header_branch
      %24 = sbr.rel (%p22) target = $region8
    $region5: #{tpu_custom_call.1} parent=1 // loop_body
      %s26 = ssub.s32 %s21, 1
      %s27 = ssub.s32 %s21, 2
      %s34 = sadd.s32 1, %s29
      %p35 = scmp.ge.s32.totalorder %s34, 2
      %s36 = scalar_select %p35, 0, %s34
      %s37 = sadd.s32 1, %s28
      %s38 = scalar_select %p35, %s37, %s28
      %p39 = scmp.ge.s32.totalorder %s38, 2
      %s40 = scalar_select %p39, 0, %s38
      %s41 = ssub.s32 %s28, %s40
      %p42 = scmp.eq.s32.totalorder %s41, 0
      %s44 = sadd.s32 %s43, 1
      %s45 = scalar_select %p42, %s43, %s44
      %p48 = pneg %p42
      %p49 = scmp.eq.s32.totalorder %s21, 3
      %p50 = por %p48, %p49
      %p51 = scmp.ne.s32.totalorder %s43, %s46
      %p52 = scmp.eq.s32.totalorder %s21, 0
      %p53 = por %p51, %p52
      %p54 = scmp.ne.s32.totalorder %s43, %s46
      %p55 = scmp.eq.s32.totalorder %s26, 3
      %p56 = por %p54, %p55
      %p57 = scmp.ne.s32.totalorder %s46, %s47
      %p58 = scmp.eq.s32.totalorder %s26, 0
      %p59 = por %p57, %p58
      %p60 = scmp.ne.s32.totalorder %s46, %s47
      %p61 = scmp.eq.s32.totalorder %s27, 3
      %p62 = por %p60, %p61
      %p64 = scmp.ne.s32.totalorder %s47, %s63
      %p65 = scmp.eq.s32.totalorder %s27, 0
      %p66 = por %p64, %p65
      %s68 = sadd.s32 %s67, 1
      %p71 = scmp.eq.s32.totalorder %s21, 3
      %p72 = scmp.ne.s32.totalorder %s67, %s69
      %p73 = scmp.eq.s32.totalorder %s21, 0
      %p74 = por %p72, %p73
      %p75 = scmp.ne.s32.totalorder %s67, %s69
      %p76 = scmp.eq.s32.totalorder %s26, 3
      %p77 = por %p75, %p76
      %p78 = scmp.ne.s32.totalorder %s69, %s70
      %p79 = scmp.eq.s32.totalorder %s26, 0
      %p80 = por %p78, %p79
      %p81 = scmp.ne.s32.totalorder %s69, %s70
      %p82 = scmp.eq.s32.totalorder %s27, 3
      %p83 = por %p81, %p82
      %p85 = scmp.ne.s32.totalorder %s70, %s84
      %p86 = scmp.eq.s32.totalorder %s27, 0
      %p87 = por %p85, %p86
      %s89 = sadd.s32 %s88, 1
      %p92 = scmp.eq.s32.totalorder %s21, 3
      %p93 = scmp.ne.s32.totalorder %s88, %s90
      %p94 = scmp.eq.s32.totalorder %s21, 0
      %p95 = por %p93, %p94
      %p96 = scmp.ne.s32.totalorder %s88, %s90
      %p97 = scmp.eq.s32.totalorder %s26, 3
      %p98 = por %p96, %p97
      %p99 = scmp.ne.s32.totalorder %s90, %s91
      %p100 = scmp.eq.s32.totalorder %s26, 0
      %p101 = por %p99, %p100
      %p102 = scmp.ne.s32.totalorder %s90, %s91
      %p103 = scmp.eq.s32.totalorder %s27, 3
      %p104 = por %p102, %p103
      %p106 = scmp.ne.s32.totalorder %s91, %s105
      %p107 = scmp.eq.s32.totalorder %s27, 0
      %p108 = por %p106, %p107
      %s110 = sadd.s32 %s109, 1
      %p113 = scmp.eq.s32.totalorder %s21, 3
      %p114 = scmp.ne.s32.totalorder %s109, %s111
      %p115 = scmp.eq.s32.totalorder %s21, 0
      %p116 = por %p114, %p115
      %p117 = scmp.ne.s32.totalorder %s109, %s111
      %p118 = scmp.eq.s32.totalorder %s26, 3
      %p119 = por %p117, %p118
      %p120 = scmp.ne.s32.totalorder %s111, %s112
      %p121 = scmp.eq.s32.totalorder %s26, 0
      %p122 = por %p120, %p121
      %p123 = scmp.ne.s32.totalorder %s111, %s112
      %p124 = scmp.eq.s32.totalorder %s27, 3
      %p125 = por %p123, %p124
      %p127 = scmp.ne.s32.totalorder %s112, %s126
      %p128 = scmp.eq.s32.totalorder %s27, 0
      %p129 = por %p127, %p128
      %s131 = sadd.s32 %s130, 1
      %p134 = scmp.eq.s32.totalorder %s21, 3
      %p135 = scmp.ne.s32.totalorder %s130, %s132
      %p136 = scmp.eq.s32.totalorder %s21, 0
      %p137 = por %p135, %p136
      %p138 = scmp.ne.s32.totalorder %s130, %s132
      %p139 = scmp.eq.s32.totalorder %s26, 3
      %p140 = por %p138, %p139
      %p141 = scmp.ne.s32.totalorder %s132, %s133
      %p142 = scmp.eq.s32.totalorder %s26, 0
      %p143 = por %p141, %p142
      %p144 = scmp.ne.s32.totalorder %s132, %s133
      %p145 = scmp.eq.s32.totalorder %s27, 3
      %p146 = por %p144, %p145
      %p148 = scmp.ne.s32.totalorder %s133, %s147
      %p149 = scmp.eq.s32.totalorder %s27, 0
      %p150 = por %p148, %p149
      %s152 = sadd.s32 %s151, 1
      %p155 = scmp.eq.s32.totalorder %s21, 3
      %p156 = scmp.ne.s32.totalorder %s151, %s153
      %p157 = scmp.eq.s32.totalorder %s21, 0
      %p158 = por %p156, %p157
      %p159 = scmp.ne.s32.totalorder %s151, %s153
      %p160 = scmp.eq.s32.totalorder %s26, 3
      %p161 = por %p159, %p160
      %p162 = scmp.ne.s32.totalorder %s153, %s154
      %p163 = scmp.eq.s32.totalorder %s26, 0
      %p164 = por %p162, %p163
      %p165 = scmp.ne.s32.totalorder %s153, %s154
      %p166 = scmp.eq.s32.totalorder %s27, 3
      %p167 = por %p165, %p166
      %p169 = scmp.ne.s32.totalorder %s154, %s168
      %p170 = scmp.eq.s32.totalorder %s27, 0
      %p171 = por %p169, %p170
      %s173 = sadd.s32 %s172, 1
      %p176 = scmp.eq.s32.totalorder %s21, 3
      %p177 = scmp.ne.s32.totalorder %s172, %s174
      %p178 = scmp.eq.s32.totalorder %s21, 0
      %p179 = por %p177, %p178
      %p180 = scmp.ne.s32.totalorder %s172, %s174
      %p181 = scmp.eq.s32.totalorder %s26, 3
      %p182 = por %p180, %p181
      %p183 = scmp.ne.s32.totalorder %s174, %s175
      %p184 = scmp.eq.s32.totalorder %s26, 0
      %p185 = por %p183, %p184
      %p186 = scmp.ne.s32.totalorder %s174, %s175
      %p187 = scmp.eq.s32.totalorder %s27, 3
      %p188 = por %p186, %p187
      %p190 = scmp.ne.s32.totalorder %s175, %s189
      %p191 = scmp.eq.s32.totalorder %s27, 0
      %p192 = por %p190, %p191
      %s193 = ssub.s32 %s28, %s40
      %s194 = ssub.s32 %s29, %s36
      %s195 = sor.u32 %s193, %s194
      %p196 = scmp.eq.s32.totalorder %s195, 0
      %s198 = sadd.s32 %s197, 1
      %s199 = scalar_select %p196, %s197, %s198
      %p202 = pneg %p196
      %p203 = scmp.eq.s32.totalorder %s21, 3
      %p204 = por %p202, %p203
      %p205 = scmp.ne.s32.totalorder %s197, %s200
      %p206 = scmp.eq.s32.totalorder %s21, 0
      %p207 = por %p205, %p206
      %p208 = scmp.ne.s32.totalorder %s197, %s200
      %p209 = scmp.eq.s32.totalorder %s26, 3
      %p210 = por %p208, %p209
      %p211 = scmp.ne.s32.totalorder %s200, %s201
      %p212 = scmp.eq.s32.totalorder %s26, 0
      %p213 = por %p211, %p212
      %p214 = scmp.ne.s32.totalorder %s200, %s201
      %p215 = scmp.eq.s32.totalorder %s27, 3
      %p216 = por %p214, %p215
      %p218 = scmp.ne.s32.totalorder %s201, %s217
      %p219 = scmp.eq.s32.totalorder %s27, 0
      %p220 = por %p218, %p219
      %p221 = scmp.le.s32.totalorder 1, %s21
      %p222 = scmp.lt.s32.totalorder %s21, 5
      %p223 = pnand %p221, %p222
      %p224 = pneg %p223
      // Predicated region
      $region9: #{tpu_custom_call.1} parent=5 // pred_check
        _
      $region10: #{tpu_custom_call.1} parent=5 // pred_check_branch
        %226 = sbr.rel (%p223) target = $region12
      $region11: #{tpu_custom_call.1} parent=5 // pred_region
        %s227 = ssub.s32 %s21, 1
        // Predicated region
        $region13: #{tpu_custom_call.1} parent=11 // pred_check
          %p228 = pneg %p80
        $region14: #{tpu_custom_call.1} parent=11 // pred_check_branch
          %230 = sbr.rel (%p228) target = $region16
        $region15: #{tpu_custom_call.1} parent=11 // pred_region
          %s232 = ssub.s32 1024, 1024
          %233 = vsyncadd [#allocation8], %s232
          %s234 = sshll.u32 [#allocation7], 4
          %s235 = int_to_ptr.vmem [resolvable:$true] %s234
          %240 = dma.hbm_to_vmem [thread:$0]  %s1, 1024, %s235, [#allocation8], 64, 64, 4
        $region16: #{tpu_custom_call.1} parent=11 // pred_fallthru
          _
        // Predicated region
        $region17: #{tpu_custom_call.1} parent=11 // pred_check
          %p241 = pneg %p101
        $region18: #{tpu_custom_call.1} parent=11 // pred_check_branch
          %243 = sbr.rel (%p241) target = $region20
        $region19: #{tpu_custom_call.1} parent=11 // pred_region
          _
        $region20: #{tpu_custom_call.1} parent=11 // pred_fallthru
          _
        // Predicated region
        $region21: #{tpu_custom_call.1} parent=11 // pred_check
          %p244 = pneg %p122
        $region22: #{tpu_custom_call.1} parent=11 // pred_check_branch
          %246 = sbr.rel (%p244) target = $region24
        $region23: #{tpu_custom_call.1} parent=11 // pred_region
          %s248 = ssub.s32 9216, 9216
          %249 = vsyncadd [#allocation8], %s248
          %s250 = sshll.u32 [#allocation9], 4
          %s251 = int_to_ptr.vmem [resolvable:$true] %s250
          %256 = dma.hbm_to_vmem [thread:$0]  %s3, 9216, %s251, [#allocation8], 64, 64, 4
        $region24: #{tpu_custom_call.1} parent=11 // pred_fallthru
          _
        // Predicated region
        $region25: #{tpu_custom_call.1} parent=11 // pred_check
          %p257 = pneg %p143
        $region26: #{tpu_custom_call.1} parent=11 // pred_check_branch
          %259 = sbr.rel (%p257) target = $region28
        $region27: #{tpu_custom_call.1} parent=11 // pred_region
          _
        $region28: #{tpu_custom_call.1} parent=11 // pred_fallthru
          _
        // Predicated region
        $region29: #{tpu_custom_call.1} parent=11 // pred_check
          %p260 = pneg %p164
        $region30: #{tpu_custom_call.1} parent=11 // pred_check_branch
          %262 = sbr.rel (%p260) target = $region32
        $region31: #{tpu_custom_call.1} parent=11 // pred_region
          %s264 = ssub.s32 1024, 1024
          %265 = vsyncadd [#allocation11], %s264
          %s266 = sshll.u32 [#allocation10], 4
          %s267 = int_to_ptr.vmem [resolvable:$true] %s266
          %272 = dma.hbm_to_vmem [thread:$0]  %s5, 1024, %s267, [#allocation11], 64, 64, 4
        $region32: #{tpu_custom_call.1} parent=11 // pred_fallthru
          _
        // Predicated region
        $region33: #{tpu_custom_call.1} parent=11 // pred_check
          %p273 = pneg %p185
        $region34: #{tpu_custom_call.1} parent=11 // pred_check_branch
          %275 = sbr.rel (%p273) target = $region36
        $region35: #{tpu_custom_call.1} parent=11 // pred_region
          _
        $region36: #{tpu_custom_call.1} parent=11 // pred_fallthru
          _
      $region12: #{tpu_custom_call.1} parent=5 // pred_fallthru
        _
      %p276 = scmp.lt.s32.totalorder %s21, 4
      // Predicated region
      $region37: #{tpu_custom_call.1} parent=5 // pred_check
        %p277 = pneg %p276
      $region38: #{tpu_custom_call.1} parent=5 // pred_check_branch
        %279 = sbr.rel (%p277) target = $region40
      $region39: #{tpu_custom_call.1} parent=5 // pred_region
        // Predicated region
        $region41: #{tpu_custom_call.1} parent=39 // pred_check
          %p280 = pneg %p53
        $region42: #{tpu_custom_call.1} parent=39 // pred_check_branch
          %282 = sbr.rel (%p280) target = $region44
        $region43: #{tpu_custom_call.1} parent=39 // pred_region
          %s283 = sand.u32 %s43, 1
          %s284 = scalar_lea.sflag [#allocation5], %s283
          %s285 = sand.u32 %s43, 1
          %s286 = smul.addr %s285, 128
          %s287 = scalar_lea.vmem [#allocation4], %s286
          %s289 = ssub.s32 2048, 2048
          %290 = vsyncadd %s284, %s289
          %s291 = smul.addr %s28, 32
          %s292 = smul.addr %s291, 64
          %s293 = scalar_lea.hbm %s0, %s292
          %s294 = sshll.u32 %s287, 4
          %s295 = int_to_ptr.vmem [resolvable:$true] %s294
          %300 = dma.hbm_to_vmem [thread:$0]  %s293, 2048, %s295, %s284, 64, 64, 4
        $region44: #{tpu_custom_call.1} parent=39 // pred_fallthru
          _
      $region40: #{tpu_custom_call.1} parent=5 // pred_fallthru
        _
      %p301 = scmp.le.s32.totalorder 1, %s21
      %p302 = scmp.lt.s32.totalorder %s21, 5
      %p303 = pnand %p301, %p302
      %p304 = pneg %p303
      // Predicated region
      $region45: #{tpu_custom_call.1} parent=5 // pred_check
        _
      $region46: #{tpu_custom_call.1} parent=5 // pred_check_branch
        %306 = sbr.rel (%p303) target = $region48
      $region47: #{tpu_custom_call.1} parent=5 // pred_region
        %s307 = ssub.s32 %s21, 1
        %s308 = sand.u32 %s46, 1
        %s309 = scalar_lea.sflag [#allocation5], %s308
        %s310 = sand.u32 %s46, 1
        %s311 = smul.addr %s310, 128
        %s312 = scalar_lea.vmem [#allocation4], %s311
        // Predicated region
        $region49: #{tpu_custom_call.1} parent=47 // pred_check
          %p313 = pneg %p59
        $region50: #{tpu_custom_call.1} parent=47 // pred_check_branch
          %315 = sbr.rel (%p313) target = $region52
        $region51: #{tpu_custom_call.1} parent=47 // pred_region
          %316 = dma.done %s309, 2048
        $region52: #{tpu_custom_call.1} parent=47 // pred_fallthru
          _
        // Predicated region
        $region53: #{tpu_custom_call.1} parent=47 // pred_check
          %p317 = pneg %p80
        $region54: #{tpu_custom_call.1} parent=47 // pred_check_branch
          %319 = sbr.rel (%p317) target = $region56
        $region55: #{tpu_custom_call.1} parent=47 // pred_region
          %320 = dma.done [#allocation8], 1024
        $region56: #{tpu_custom_call.1} parent=47 // pred_fallthru
          _
        // Predicated region
        $region57: #{tpu_custom_call.1} parent=47 // pred_check
          %p321 = pneg %p122
        $region58: #{tpu_custom_call.1} parent=47 // pred_check_branch
          %323 = sbr.rel (%p321) target = $region60
        $region59: #{tpu_custom_call.1} parent=47 // pred_region
          %324 = dma.done [#allocation8], 9216
        $region60: #{tpu_custom_call.1} parent=47 // pred_fallthru
          _
        // Predicated region
        $region61: #{tpu_custom_call.1} parent=47 // pred_check
          %p325 = pneg %p164
        $region62: #{tpu_custom_call.1} parent=47 // pred_check_branch
          %327 = sbr.rel (%p325) target = $region64
        $region63: #{tpu_custom_call.1} parent=47 // pred_region
          %328 = dma.done [#allocation11], 1024
        $region64: #{tpu_custom_call.1} parent=47 // pred_fallthru
          _
        %s329 = sand.u32 %s46, 1
        %s330 = scalar_lea.sflag [#allocation5], %s329
        %s331 = sand.u32 %s46, 1
        %s332 = smul.addr %s331, 128
        %s333 = scalar_lea.vmem [#allocation4], %s332
        %p334 = pneg %p59
        %p335 = pneg %p56
        %p336 = pneg %p80
        %p337 = pneg %p77
        %p338 = pneg %p101
        %p339 = pneg %p98
        %p340 = pneg %p122
        %p341 = pneg %p119
        %p342 = pneg %p143
        %p343 = pneg %p140
        %p344 = pneg %p164
        %p345 = pneg %p161
        %p346 = pneg %p185
        %p347 = pneg %p182
        %p348 = pneg %p213
        %p349 = pneg %p210
        %s350 = sand.u32 %s200, 1
        %s351 = scalar_lea.sflag [#allocation6], %s350
        %s352 = sand.u32 %s200, 1
        %s353 = smul.addr %s352, 128
        %s354 = scalar_lea.vmem [#allocation12], %s353
        %s355 = smul.u32 8, %s31
        %p357 = scmp.eq.s32.totalorder %s31, 0
        // Predicated region
        $region65: #{tpu_custom_call.1} parent=47 // pred_check
          %p358 = pneg %p357
        $region66: #{tpu_custom_call.1} parent=47 // pred_check_branch
          %360 = sbr.rel (%p358) target = $region68
        $region67: #{tpu_custom_call.1} parent=47 // pred_region
          %361 = vst [vmem:[#allocation2] sm:$0xff] 0.0
          %362 = vst [vmem:[#allocation2 + $0x8] sm:$0xff] 0.0
          %363 = vst [vmem:[#allocation2 + $0x10] sm:$0x3] 0.0
          %s364 = scalar_lea.vmem [#allocation2], 408
          %365 = vst [vmem:[%s364] sm:$0xff] 0.0
          %366 = vst [vmem:[%s364 + $0x8] sm:$0xff] 0.0
          %367 = vst [vmem:[%s364 + $0x10] sm:$0x3] 0.0
          %368 = vst [vmem:[#allocation2] sm:$0x1] 0.0
          %369 = vst [vmem:[#allocation2 + $0x18] sm:$0x1] 0.0
          %370 = vst [vmem:[#allocation2 + $0x30] sm:$0x1] 0.0
          %371 = vst [vmem:[#allocation2 + $0x48] sm:$0x1] 0.0
          %372 = vst [vmem:[#allocation2 + $0x60] sm:$0x1] 0.0
          %373 = vst [vmem:[#allocation2 + $0x78] sm:$0x1] 0.0
          %374 = vst [vmem:[#allocation2 + $0x90] sm:$0x1] 0.0
          %375 = vst [vmem:[#allocation2 + $0xa8] sm:$0x1] 0.0
          %376 = vst [vmem:[#allocation2 + $0xc0] sm:$0x1] 0.0
          %377 = vst [vmem:[#allocation2 + $0xd8] sm:$0x1] 0.0
          %378 = vst [vmem:[#allocation2 + $0xf0] sm:$0x1] 0.0
          %379 = vst [vmem:[#allocation2 + $0x108] sm:$0x1] 0.0
          %380 = vst [vmem:[#allocation2 + $0x120] sm:$0x1] 0.0
          %381 = vst [vmem:[#allocation2 + $0x138] sm:$0x1] 0.0
          %382 = vst [vmem:[#allocation2 + $0x150] sm:$0x1] 0.0
          %383 = vst [vmem:[#allocation2 + $0x168] sm:$0x1] 0.0
          %384 = vst [vmem:[#allocation2 + $0x180] sm:$0x1] 0.0
          %385 = vst [vmem:[#allocation2 + $0x198] sm:$0x1] 0.0
          %386 = vst [vmem:[#allocation2 + $0x11] sm:$0x1] 0.0
          %387 = vst [vmem:[#allocation2 + $0x29] sm:$0x1] 0.0
          %388 = vst [vmem:[#allocation2 + $0x41] sm:$0x1] 0.0
          %389 = vst [vmem:[#allocation2 + $0x59] sm:$0x1] 0.0
          %390 = vst [vmem:[#allocation2 + $0x71] sm:$0x1] 0.0
          %391 = vst [vmem:[#allocation2 + $0x89] sm:$0x1] 0.0
          %392 = vst [vmem:[#allocation2 + $0xa1] sm:$0x1] 0.0
          %393 = vst [vmem:[#allocation2 + $0xb9] sm:$0x1] 0.0
          %394 = vst [vmem:[#allocation2 + $0xd1] sm:$0x1] 0.0
          %395 = vst [vmem:[#allocation2 + $0xe9] sm:$0x1] 0.0
          %396 = vst [vmem:[#allocation2 + $0x101] sm:$0x1] 0.0
          %397 = vst [vmem:[#allocation2 + $0x119] sm:$0x1] 0.0
          %398 = vst [vmem:[#allocation2 + $0x131] sm:$0x1] 0.0
          %399 = vst [vmem:[#allocation2 + $0x149] sm:$0x1] 0.0
          %400 = vst [vmem:[#allocation2 + $0x161] sm:$0x1] 0.0
          %401 = vst [vmem:[#allocation2 + $0x179] sm:$0x1] 0.0
          %402 = vst [vmem:[#allocation2 + $0x191] sm:$0x1] 0.0
          %403 = vst [vmem:[#allocation2 + $0x1a9] sm:$0x1] 0.0
          %v404 = vld [vmem:[%s312] sm:$0xf]
          %v405 = vld [vmem:[%s312 + $0x4] sm:$0xf]
          %v406 = vld [vmem:[%s312 + $0x8] sm:$0xf]
          %v407 = vld [vmem:[%s312 + $0xc] sm:$0xf]
          %v408 = vld [vmem:[%s312 + $0x10] sm:$0xf]
          %v409 = vld [vmem:[%s312 + $0x14] sm:$0xf]
          %v410 = vld [vmem:[%s312 + $0x18] sm:$0xf]
          %v411 = vld [vmem:[%s312 + $0x1c] sm:$0xf]
          %v412 = vld [vmem:[%s312 + $0x20] sm:$0xf]
          %v413 = vld [vmem:[%s312 + $0x24] sm:$0xf]
          %v414 = vld [vmem:[%s312 + $0x28] sm:$0xf]
          %v415 = vld [vmem:[%s312 + $0x2c] sm:$0xf]
          %v416 = vld [vmem:[%s312 + $0x30] sm:$0xf]
          %v417 = vld [vmem:[%s312 + $0x34] sm:$0xf]
          %v418 = vld [vmem:[%s312 + $0x38] sm:$0xf]
          %v419 = vld [vmem:[%s312 + $0x3c] sm:$0xf]
          %v420 = vld [vmem:[%s312 + $0x40] sm:$0xf]
          %v421 = vld [vmem:[%s312 + $0x44] sm:$0xf]
          %v422 = vld [vmem:[%s312 + $0x48] sm:$0xf]
          %v423 = vld [vmem:[%s312 + $0x4c] sm:$0xf]
          %v424 = vld [vmem:[%s312 + $0x50] sm:$0xf]
          %v425 = vld [vmem:[%s312 + $0x54] sm:$0xf]
          %v426 = vld [vmem:[%s312 + $0x58] sm:$0xf]
          %v427 = vld [vmem:[%s312 + $0x5c] sm:$0xf]
          %v428 = vld [vmem:[%s312 + $0x60] sm:$0xf]
          %v429 = vld [vmem:[%s312 + $0x64] sm:$0xf]
          %v430 = vld [vmem:[%s312 + $0x68] sm:$0xf]
          %v431 = vld [vmem:[%s312 + $0x6c] sm:$0xf]
          %v432 = vld [vmem:[%s312 + $0x70] sm:$0xf]
          %v433 = vld [vmem:[%s312 + $0x74] sm:$0xf]
          %v434 = vld [vmem:[%s312 + $0x78] sm:$0xf]
          %v435 = vld [vmem:[%s312 + $0x7c] sm:$0xf]
          %v436 = vld [vmem:[#allocation7] sm:$0xf]
          %v437 = vld [vmem:[#allocation7 + $0x4] sm:$0xf]
          %v438 = vld [vmem:[#allocation7 + $0x8] sm:$0xf]
          %v439 = vld [vmem:[#allocation7 + $0xc] sm:$0xf]
          %v440 = vld [vmem:[#allocation7 + $0x10] sm:$0xf]
          %v441 = vld [vmem:[#allocation7 + $0x14] sm:$0xf]
          %v442 = vld [vmem:[#allocation7 + $0x18] sm:$0xf]
          %v443 = vld [vmem:[#allocation7 + $0x1c] sm:$0xf]
          %v444 = vld [vmem:[#allocation7 + $0x20] sm:$0xf]
          %v445 = vld [vmem:[#allocation7 + $0x24] sm:$0xf]
          %v446 = vld [vmem:[#allocation7 + $0x28] sm:$0xf]
          %v447 = vld [vmem:[#allocation7 + $0x2c] sm:$0xf]
          %v448 = vld [vmem:[#allocation7 + $0x30] sm:$0xf]
          %v449 = vld [vmem:[#allocation7 + $0x34] sm:$0xf]
          %v450 = vld [vmem:[#allocation7 + $0x38] sm:$0xf]
          %v451 = vld [vmem:[#allocation7 + $0x3c] sm:$0xf]
          %v452 = vld [vmem:[%s2] sm:$0x1]
          %v454 = vlaneseq
          %v455 = vshrl.u32 %v454, 7
          %v456 = vsub.s32 0, %v455
          %v457 = vrot.slane %v452, %v456
          %v491 = vunpack.c.l.b16 %v404
          %v492 = vunpack.c.l.b16 %v405
          %v493 = vunpack.c.l.b16 %v406
          %v494 = vunpack.c.l.b16 %v407
          %v495 = vunpack.c.l.b16 %v408
          %v496 = vunpack.c.l.b16 %v409
          %v497 = vunpack.c.l.b16 %v410
          %v498 = vunpack.c.l.b16 %v411
          %v499 = vunpack.c.l.b16 %v412
          %v500 = vunpack.c.l.b16 %v413
          %v501 = vunpack.c.l.b16 %v414
          %v502 = vunpack.c.l.b16 %v415
          %v503 = vunpack.c.l.b16 %v416
          %v504 = vunpack.c.l.b16 %v417
          %v505 = vunpack.c.l.b16 %v418
          %v506 = vunpack.c.l.b16 %v419
          %v507 = vunpack.c.l.b16 %v420
          %v508 = vunpack.c.l.b16 %v421
          %v509 = vunpack.c.l.b16 %v422
          %v510 = vunpack.c.l.b16 %v423
          %v511 = vunpack.c.l.b16 %v424
          %v512 = vunpack.c.l.b16 %v425
          %v513 = vunpack.c.l.b16 %v426
          %v514 = vunpack.c.l.b16 %v427
          %v515 = vunpack.c.l.b16 %v428
          %v516 = vunpack.c.l.b16 %v429
          %v517 = vunpack.c.l.b16 %v430
          %v518 = vunpack.c.l.b16 %v431
          %v519 = vunpack.c.l.b16 %v432
          %v520 = vunpack.c.l.b16 %v433
          %v521 = vunpack.c.l.b16 %v434
          %v522 = vunpack.c.l.b16 %v435
          %v523 = vpack.c.b16 %v492, %v491
          %v524 = vpack.c.b16 %v494, %v493
          %v525 = vpack.c.b16 %v496, %v495
          %v526 = vpack.c.b16 %v498, %v497
          %v527 = vpack.c.b16 %v500, %v499
          %v528 = vpack.c.b16 %v502, %v501
          %v529 = vpack.c.b16 %v504, %v503
          %v530 = vpack.c.b16 %v506, %v505
          %v531 = vpack.c.b16 %v508, %v507
          %v532 = vpack.c.b16 %v510, %v509
          %v533 = vpack.c.b16 %v512, %v511
          %v534 = vpack.c.b16 %v514, %v513
          %v535 = vpack.c.b16 %v516, %v515
          %v536 = vpack.c.b16 %v518, %v517
          %v537 = vpack.c.b16 %v520, %v519
          %v538 = vpack.c.b16 %v522, %v521
          %v571 = vunpack.c.l.b16 %v436
          %v572 = vunpack.c.l.b16 %v437
          %v573 = vunpack.c.l.b16 %v438
          %v574 = vunpack.c.l.b16 %v439
          %v575 = vunpack.c.l.b16 %v440
          %v576 = vunpack.c.l.b16 %v441
          %v577 = vunpack.c.l.b16 %v442
          %v578 = vunpack.c.l.b16 %v443
          %v579 = vunpack.c.l.b16 %v444
          %v580 = vunpack.c.l.b16 %v445
          %v581 = vunpack.c.l.b16 %v446
          %v582 = vunpack.c.l.b16 %v447
          %v583 = vunpack.c.l.b16 %v448
          %v584 = vunpack.c.l.b16 %v449
          %v585 = vunpack.c.l.b16 %v450
          %v586 = vunpack.c.l.b16 %v451
          %v587 = vpack.c.b16 %v572, %v571
          %v588 = vpack.c.b16 %v574, %v573
          %v589 = vpack.c.b16 %v576, %v575
          %v590 = vpack.c.b16 %v578, %v577
          %v591 = vpack.c.b16 %v580, %v579
          %v592 = vpack.c.b16 %v582, %v581
          %v593 = vpack.c.b16 %v584, %v583
          %v594 = vpack.c.b16 %v586, %v585
          %603 = vmatprep.subr.bf16.mxu0 0
          %604 = vmatpush1.bf16.msra.mxu0 %v587
          %605 = vmatprep.subr.bf16.mxu0 0
          %606 = vmatpush1.bf16.msra.mxu0 %v588
          %607 = vmatprep.subr.bf16.mxu0 0
          %608 = vmatpush1.bf16.msra.mxu0 %v589
          %609 = vmatprep.subr.bf16.mxu0 0
          %610 = vmatpush1.bf16.msra.mxu0 %v590
          %611 = vmatprep.subr.bf16.mxu0 0
          %612 = vmatpush1.bf16.msra.mxu0 %v591
          %613 = vmatprep.subr.bf16.mxu0 0
          %614 = vmatpush1.bf16.msra.mxu0 %v592
          %615 = vmatprep.subr.bf16.mxu0 0
          %616 = vmatpush1.bf16.msra.mxu0 %v593
          %617 = vmatprep.subr.bf16.mxu0 0
          %618 = vmatpush1.bf16.msra.mxu0 %v594
          %619 = vmatprep.subr.bf16.mxu0 0
          %620 = vmatpush1.bf16.msra.mxu0 0
          %621 = vmatprep.subr.bf16.mxu0 0
          %622 = vmatpush1.bf16.msra.mxu0 0
          %623 = vmatprep.subr.bf16.mxu0 0
          %624 = vmatpush1.bf16.msra.mxu0 0
          %625 = vmatprep.subr.bf16.mxu0 0
          %626 = vmatpush1.bf16.msra.mxu0 0
          %627 = vmatprep.subr.bf16.mxu0 0
          %628 = vmatpush1.bf16.msra.mxu0 0
          %629 = vmatprep.subr.bf16.mxu0 0
          %630 = vmatpush1.bf16.msra.mxu0 0
          %631 = vmatprep.subr.bf16.mxu0 0
          %632 = vmatpush1.bf16.msra.mxu0 0
          %633 = vmatprep.subr.bf16.mxu0 0
          %634 = vmatpush1.bf16.msra.mxu0 0
          %635 = vmatprep.mubr.bf16.mxu0 0
          %636 = vmatmul.mubr.bf16.gmra.mrb[0].mxu0 %v523
          %v637 = vpop.f32.mrb[0].mxu0
          %v638 = vadd.f32 %v457, %v637
          %v639 = vpop.f32.mrb[0].mxu0
          %v640 = vpop.f32.mrb[0].mxu0
          %v641 = vadd.f32 %v457, %v640
          %v642 = vpop.f32.mrb[0].mxu0
          %643 = vmatprep.mubr.bf16.mxu0 0
          %644 = vmatmul.mubr.bf16.gmra.mrb[0].mxu0 %v524
          %v645 = vpop.f32.mrb[0].mxu0
          %v646 = vadd.f32 %v457, %v645
          %v647 = vpop.f32.mrb[0].mxu0
          %v648 = vpop.f32.mrb[0].mxu0
          %v649 = vadd.f32 %v457, %v648
          %v650 = vpop.f32.mrb[0].mxu0
          %651 = vmatprep.mubr.bf16.mxu0 0
          %652 = vmatmul.mubr.bf16.gmra.mrb[0].mxu0 %v525
          %v653 = vpop.f32.mrb[0].mxu0
          %v654 = vadd.f32 %v457, %v653
          %v655 = vpop.f32.mrb[0].mxu0
          %v656 = vpop.f32.mrb[0].mxu0
          %v657 = vadd.f32 %v457, %v656
          %v658 = vpop.f32.mrb[0].mxu0
          %659 = vmatprep.mubr.bf16.mxu0 0
          %660 = vmatmul.mubr.bf16.gmra.mrb[0].mxu0 %v526
          %v661 = vpop.f32.mrb[0].mxu0
          %v662 = vadd.f32 %v457, %v661
          %v663 = vpop.f32.mrb[0].mxu0
          %v664 = vpop.f32.mrb[0].mxu0
          %v665 = vadd.f32 %v457, %v664
          %v666 = vpop.f32.mrb[0].mxu0
          %667 = vmatprep.mubr.bf16.mxu0 0
          %668 = vmatmul.mubr.bf16.gmra.mrb[0].mxu0 %v527
          %v669 = vpop.f32.mrb[0].mxu0
          %v670 = vadd.f32 %v457, %v669
          %v671 = vpop.f32.mrb[0].mxu0
          %v672 = vpop.f32.mrb[0].mxu0
          %v673 = vadd.f32 %v457, %v672
          %v674 = vpop.f32.mrb[0].mxu0
          %675 = vmatprep.mubr.bf16.mxu0 0
          %676 = vmatmul.mubr.bf16.gmra.mrb[0].mxu0 %v528
          %v677 = vpop.f32.mrb[0].mxu0
          %v678 = vadd.f32 %v457, %v677
          %v679 = vpop.f32.mrb[0].mxu0
          %v680 = vpop.f32.mrb[0].mxu0
          %v681 = vadd.f32 %v457, %v680
          %v682 = vpop.f32.mrb[0].mxu0
          %683 = vmatprep.mubr.bf16.mxu0 0
          %684 = vmatmul.mubr.bf16.gmra.mrb[0].mxu0 %v529
          %v685 = vpop.f32.mrb[0].mxu0
          %v686 = vadd.f32 %v457, %v685
          %v687 = vpop.f32.mrb[0].mxu0
          %v688 = vpop.f32.mrb[0].mxu0
          %v689 = vadd.f32 %v457, %v688
          %v690 = vpop.f32.mrb[0].mxu0
          %691 = vmatprep.mubr.bf16.mxu0 0
          %692 = vmatmul.mubr.bf16.gmra.mrb[0].mxu0 %v530
          %v693 = vpop.f32.mrb[0].mxu0
          %v694 = vadd.f32 %v457, %v693
          %v695 = vpop.f32.mrb[0].mxu0
          %v696 = vpop.f32.mrb[0].mxu0
          %v697 = vadd.f32 %v457, %v696
          %v698 = vpop.f32.mrb[0].mxu0
          %699 = vmatprep.mubr.bf16.mxu0 0
          %700 = vmatmul.mubr.bf16.gmra.mrb[0].mxu0 %v531
          %v701 = vpop.f32.mrb[0].mxu0
          %v702 = vadd.f32 %v457, %v701
          %v703 = vpop.f32.mrb[0].mxu0
          %v704 = vpop.f32.mrb[0].mxu0
          %v705 = vadd.f32 %v457, %v704
          %v706 = vpop.f32.mrb[0].mxu0
          %707 = vmatprep.mubr.bf16.mxu0 0
          %708 = vmatmul.mubr.bf16.gmra.mrb[0].mxu0 %v532
          %v709 = vpop.f32.mrb[0].mxu0
          %v710 = vadd.f32 %v457, %v709
          %v711 = vpop.f32.mrb[0].mxu0
          %v712 = vpop.f32.mrb[0].mxu0
          %v713 = vadd.f32 %v457, %v712
          %v714 = vpop.f32.mrb[0].mxu0
          %715 = vmatprep.mubr.bf16.mxu0 0
          %716 = vmatmul.mubr.bf16.gmra.mrb[0].mxu0 %v533
          %v717 = vpop.f32.mrb[0].mxu0
          %v718 = vadd.f32 %v457, %v717
          %v719 = vpop.f32.mrb[0].mxu0
          %v720 = vpop.f32.mrb[0].mxu0
          %v721 = vadd.f32 %v457, %v720
          %v722 = vpop.f32.mrb[0].mxu0
          %723 = vmatprep.mubr.bf16.mxu0 0
          %724 = vmatmul.mubr.bf16.gmra.mrb[0].mxu0 %v534
          %v725 = vpop.f32.mrb[0].mxu0
          %v726 = vadd.f32 %v457, %v725
          %v727 = vpop.f32.mrb[0].mxu0
          %v728 = vpop.f32.mrb[0].mxu0
          %v729 = vadd.f32 %v457, %v728
          %v730 = vpop.f32.mrb[0].mxu0
          %731 = vmatprep.mubr.bf16.mxu0 0
          %732 = vmatmul.mubr.bf16.gmra.mrb[0].mxu0 %v535
          %v733 = vpop.f32.mrb[0].mxu0
          %v734 = vadd.f32 %v457, %v733
          %v735 = vpop.f32.mrb[0].mxu0
          %v736 = vpop.f32.mrb[0].mxu0
          %v737 = vadd.f32 %v457, %v736
          %v738 = vpop.f32.mrb[0].mxu0
          %739 = vmatprep.mubr.bf16.mxu0 0
          %740 = vmatmul.mubr.bf16.gmra.mrb[0].mxu0 %v536
          %v741 = vpop.f32.mrb[0].mxu0
          %v742 = vadd.f32 %v457, %v741
          %v743 = vpop.f32.mrb[0].mxu0
          %v744 = vpop.f32.mrb[0].mxu0
          %v745 = vadd.f32 %v457, %v744
          %v746 = vpop.f32.mrb[0].mxu0
          %747 = vmatprep.mubr.bf16.mxu0 0
          %748 = vmatmul.mubr.bf16.gmra.mrb[0].mxu0 %v537
          %v749 = vpop.f32.mrb[0].mxu0
          %v750 = vadd.f32 %v457, %v749
          %v751 = vpop.f32.mrb[0].mxu0
          %v752 = vpop.f32.mrb[0].mxu0
          %v753 = vadd.f32 %v457, %v752
          %v754 = vpop.f32.mrb[0].mxu0
          %755 = vmatprep.mubr.bf16.mxu0 0
          %756 = vmatmul.mubr.bf16.gmra.mrb[0].mxu0 %v538
          %v757 = vpop.f32.mrb[0].mxu0
          %v758 = vadd.f32 %v457, %v757
          %v759 = vpop.f32.mrb[0].mxu0
          %v760 = vpop.f32.mrb[0].mxu0
          %v761 = vadd.f32 %v457, %v760
          %v762 = vpop.f32.mrb[0].mxu0
          %763 = vdwg.mxu0
          %v764 = vmax.f32 %v638, 0.0
          %v765 = vmax.f32 %v641, 0.0
          %v766 = vmax.f32 %v646, 0.0
          %v767 = vmax.f32 %v649, 0.0
          %v768 = vmax.f32 %v654, 0.0
          %v769 = vmax.f32 %v657, 0.0
          %v770 = vmax.f32 %v662, 0.0
          %v771 = vmax.f32 %v665, 0.0
          %v772 = vmax.f32 %v670, 0.0
          %v773 = vmax.f32 %v673, 0.0
          %v774 = vmax.f32 %v678, 0.0
          %v775 = vmax.f32 %v681, 0.0
          %v776 = vmax.f32 %v686, 0.0
          %v777 = vmax.f32 %v689, 0.0
          %v778 = vmax.f32 %v694, 0.0
          %v779 = vmax.f32 %v697, 0.0
          %v780 = vmax.f32 %v702, 0.0
          %v781 = vmax.f32 %v705, 0.0
          %v782 = vmax.f32 %v710, 0.0
          %v783 = vmax.f32 %v713, 0.0
          %v784 = vmax.f32 %v718, 0.0
          %v785 = vmax.f32 %v721, 0.0
          %v786 = vmax.f32 %v726, 0.0
          %v787 = vmax.f32 %v729, 0.0
          %v788 = vmax.f32 %v734, 0.0
          %v789 = vmax.f32 %v737, 0.0
          %v790 = vmax.f32 %v742, 0.0
          %v791 = vmax.f32 %v745, 0.0
          %v792 = vmax.f32 %v750, 0.0
          %v793 = vmax.f32 %v753, 0.0
          %v794 = vmax.f32 %v758, 0.0
          %v795 = vmax.f32 %v761, 0.0
          %s796 = scalar_lea.vmem [#allocation2], 24
          %797 = vst [vmem:[%s796 + $0x1] sm:$0xff] %v764
          %798 = vst [vmem:[%s796 + $0x9] sm:$0xff] %v765
          %799 = vst [vmem:[%s796 + $0x19] sm:$0xff] %v766
          %800 = vst [vmem:[%s796 + $0x21] sm:$0xff] %v767
          %801 = vst [vmem:[%s796 + $0x31] sm:$0xff] %v768
          %802 = vst [vmem:[%s796 + $0x39] sm:$0xff] %v769
          %803 = vst [vmem:[%s796 + $0x49] sm:$0xff] %v770
          %804 = vst [vmem:[%s796 + $0x51] sm:$0xff] %v771
          %805 = vst [vmem:[%s796 + $0x61] sm:$0xff] %v772
          %806 = vst [vmem:[%s796 + $0x69] sm:$0xff] %v773
          %807 = vst [vmem:[%s796 + $0x79] sm:$0xff] %v774
          %808 = vst [vmem:[%s796 + $0x81] sm:$0xff] %v775
          %809 = vst [vmem:[%s796 + $0x91] sm:$0xff] %v776
          %810 = vst [vmem:[%s796 + $0x99] sm:$0xff] %v777
          %811 = vst [vmem:[%s796 + $0xa9] sm:$0xff] %v778
          %812 = vst [vmem:[%s796 + $0xb1] sm:$0xff] %v779
          %813 = vst [vmem:[%s796 + $0xc1] sm:$0xff] %v780
          %814 = vst [vmem:[%s796 + $0xc9] sm:$0xff] %v781
          %815 = vst [vmem:[%s796 + $0xd9] sm:$0xff] %v782
          %816 = vst [vmem:[%s796 + $0xe1] sm:$0xff] %v783
          %817 = vst [vmem:[%s796 + $0xf1] sm:$0xff] %v784
          %818 = vst [vmem:[%s796 + $0xf9] sm:$0xff] %v785
          %819 = vst [vmem:[%s796 + $0x109] sm:$0xff] %v786
          %820 = vst [vmem:[%s796 + $0x111] sm:$0xff] %v787
          %821 = vst [vmem:[%s796 + $0x121] sm:$0xff] %v788
          %822 = vst [vmem:[%s796 + $0x129] sm:$0xff] %v789
          %823 = vst [vmem:[%s796 + $0x139] sm:$0xff] %v790
          %824 = vst [vmem:[%s796 + $0x141] sm:$0xff] %v791
          %825 = vst [vmem:[%s796 + $0x151] sm:$0xff] %v792
          %826 = vst [vmem:[%s796 + $0x159] sm:$0xff] %v793
          %827 = vst [vmem:[%s796 + $0x169] sm:$0xff] %v794
          %828 = vst [vmem:[%s796 + $0x171] sm:$0xff] %v795
        $region68: #{tpu_custom_call.1} parent=47 // pred_fallthru
          _
        %s829 = smul.u32 %s31, 8
        %s830 = smul.u32 %s829, 24
        %s831 = scalar_lea.vmem [#allocation2], %s830
        %v832 = vld [vmem:[%s831] sm:$0xff]
        %v833 = vld [vmem:[%s831 + $0x8] sm:$0xff]
        %v834 = vld [vmem:[%s831 + $0x18] sm:$0xff]
        %v835 = vld [vmem:[%s831 + $0x20] sm:$0xff]
        %v836 = vld [vmem:[%s831 + $0x30] sm:$0xff]
        %v837 = vld [vmem:[%s831 + $0x38] sm:$0xff]
        %v838 = vld [vmem:[%s831 + $0x48] sm:$0xff]
        %v839 = vld [vmem:[%s831 + $0x50] sm:$0xff]
        %v840 = vld [vmem:[%s831 + $0x60] sm:$0xff]
        %v841 = vld [vmem:[%s831 + $0x68] sm:$0xff]
        %v842 = vld [vmem:[%s831 + $0x78] sm:$0xff]
        %v843 = vld [vmem:[%s831 + $0x80] sm:$0xff]
        %v844 = vld [vmem:[%s831 + $0x90] sm:$0xff]
        %v845 = vld [vmem:[%s831 + $0x98] sm:$0xff]
        %v846 = vld [vmem:[%s831 + $0xa8] sm:$0xff]
        %v847 = vld [vmem:[%s831 + $0xb0] sm:$0xff]
        %v848 = vpack.c.bf16 %v833, %v832
        %v849 = vpack.c.bf16 %v835, %v834
        %v850 = vpack.c.bf16 %v837, %v836
        %v851 = vpack.c.bf16 %v839, %v838
        %v852 = vpack.c.bf16 %v841, %v840
        %v853 = vpack.c.bf16 %v843, %v842
        %v854 = vpack.c.bf16 %v845, %v844
        %v855 = vpack.c.bf16 %v847, %v846
        %856 = vst [vmem:[#allocation3] sm:$0xff] %v848
        %857 = vst [vmem:[#allocation3 + $0x48] sm:$0xff] %v849
        %858 = vst [vmem:[#allocation3 + $0x90] sm:$0xff] %v850
        %859 = vst [vmem:[#allocation3 + $0xd8] sm:$0xff] %v851
        %860 = vst [vmem:[#allocation3 + $0x120] sm:$0xff] %v852
        %861 = vst [vmem:[#allocation3 + $0x168] sm:$0xff] %v853
        %862 = vst [vmem:[#allocation3 + $0x1b0] sm:$0xff] %v854
        %863 = vst [vmem:[#allocation3 + $0x1f8] sm:$0xff] %v855
        %v864 = vld [vmem:[%s831 + $0x1] sm:$0xff]
        %v865 = vld [vmem:[%s831 + $0x9] sm:$0xff]
        %v866 = vld [vmem:[%s831 + $0x19] sm:$0xff]
        %v867 = vld [vmem:[%s831 + $0x21] sm:$0xff]
        %v868 = vld [vmem:[%s831 + $0x31] sm:$0xff]
        %v869 = vld [vmem:[%s831 + $0x39] sm:$0xff]
        %v870 = vld [vmem:[%s831 + $0x49] sm:$0xff]
        %v871 = vld [vmem:[%s831 + $0x51] sm:$0xff]
        %v872 = vld [vmem:[%s831 + $0x61] sm:$0xff]
        %v873 = vld [vmem:[%s831 + $0x69] sm:$0xff]
        %v874 = vld [vmem:[%s831 + $0x79] sm:$0xff]
        %v875 = vld [vmem:[%s831 + $0x81] sm:$0xff]
        %v876 = vld [vmem:[%s831 + $0x91] sm:$0xff]
        %v877 = vld [vmem:[%s831 + $0x99] sm:$0xff]
        %v878 = vld [vmem:[%s831 + $0xa9] sm:$0xff]
        %v879 = vld [vmem:[%s831 + $0xb1] sm:$0xff]
        %v880 = vpack.c.bf16 %v865, %v864
        %v881 = vpack.c.bf16 %v867, %v866
        %v882 = vpack.c.bf16 %v869, %v868
        %v883 = vpack.c.bf16 %v871, %v870
        %v884 = vpack.c.bf16 %v873, %v872
        %v885 = vpack.c.bf16 %v875, %v874
        %v886 = vpack.c.bf16 %v877, %v876
        %v887 = vpack.c.bf16 %v879, %v878
        %888 = vst [vmem:[#allocation3 + $0x8] sm:$0xff] %v880
        %889 = vst [vmem:[#allocation3 + $0x50] sm:$0xff] %v881
        %890 = vst [vmem:[#allocation3 + $0x98] sm:$0xff] %v882
        %891 = vst [vmem:[#allocation3 + $0xe0] sm:$0xff] %v883
        %892 = vst [vmem:[#allocation3 + $0x128] sm:$0xff] %v884
        %893 = vst [vmem:[#allocation3 + $0x170] sm:$0xff] %v885
        %894 = vst [vmem:[#allocation3 + $0x1b8] sm:$0xff] %v886
        %895 = vst [vmem:[#allocation3 + $0x200] sm:$0xff] %v887
        %v896 = vld [vmem:[%s831 + $0x2] sm:$0xff]
        %v897 = vld [vmem:[%s831 + $0xa] sm:$0xff]
        %v898 = vld [vmem:[%s831 + $0x1a] sm:$0xff]
        %v899 = vld [vmem:[%s831 + $0x22] sm:$0xff]
        %v900 = vld [vmem:[%s831 + $0x32] sm:$0xff]
        %v901 = vld [vmem:[%s831 + $0x3a] sm:$0xff]
        %v902 = vld [vmem:[%s831 + $0x4a] sm:$0xff]
        %v903 = vld [vmem:[%s831 + $0x52] sm:$0xff]
        %v904 = vld [vmem:[%s831 + $0x62] sm:$0xff]
        %v905 = vld [vmem:[%s831 + $0x6a] sm:$0xff]
        %v906 = vld [vmem:[%s831 + $0x7a] sm:$0xff]
        %v907 = vld [vmem:[%s831 + $0x82] sm:$0xff]
        %v908 = vld [vmem:[%s831 + $0x92] sm:$0xff]
        %v909 = vld [vmem:[%s831 + $0x9a] sm:$0xff]
        %v910 = vld [vmem:[%s831 + $0xaa] sm:$0xff]
        %v911 = vld [vmem:[%s831 + $0xb2] sm:$0xff]
        %v912 = vpack.c.bf16 %v897, %v896
        %v913 = vpack.c.bf16 %v899, %v898
        %v914 = vpack.c.bf16 %v901, %v900
        %v915 = vpack.c.bf16 %v903, %v902
        %v916 = vpack.c.bf16 %v905, %v904
        %v917 = vpack.c.bf16 %v907, %v906
        %v918 = vpack.c.bf16 %v909, %v908
        %v919 = vpack.c.bf16 %v911, %v910
        %920 = vst [vmem:[#allocation3 + $0x10] sm:$0xff] %v912
        %921 = vst [vmem:[#allocation3 + $0x58] sm:$0xff] %v913
        %922 = vst [vmem:[#allocation3 + $0xa0] sm:$0xff] %v914
        %923 = vst [vmem:[#allocation3 + $0xe8] sm:$0xff] %v915
        %924 = vst [vmem:[#allocation3 + $0x130] sm:$0xff] %v916
        %925 = vst [vmem:[#allocation3 + $0x178] sm:$0xff] %v917
        %926 = vst [vmem:[#allocation3 + $0x1c0] sm:$0xff] %v918
        %927 = vst [vmem:[#allocation3 + $0x208] sm:$0xff] %v919
        %s928 = sadd.s32 %s829, 1
        %s929 = smul.u32 %s928, 24
        %s930 = scalar_lea.vmem [#allocation2], %s929
        %v931 = vld [vmem:[%s930] sm:$0xff]
        %v932 = vld [vmem:[%s930 + $0x8] sm:$0xff]
        %v933 = vld [vmem:[%s930 + $0x18] sm:$0xff]
        %v934 = vld [vmem:[%s930 + $0x20] sm:$0xff]
        %v935 = vld [vmem:[%s930 + $0x30] sm:$0xff]
        %v936 = vld [vmem:[%s930 + $0x38] sm:$0xff]
        %v937 = vld [vmem:[%s930 + $0x48] sm:$0xff]
        %v938 = vld [vmem:[%s930 + $0x50] sm:$0xff]
        %v939 = vld [vmem:[%s930 + $0x60] sm:$0xff]
        %v940 = vld [vmem:[%s930 + $0x68] sm:$0xff]
        %v941 = vld [vmem:[%s930 + $0x78] sm:$0xff]
        %v942 = vld [vmem:[%s930 + $0x80] sm:$0xff]
        %v943 = vld [vmem:[%s930 + $0x90] sm:$0xff]
        %v944 = vld [vmem:[%s930 + $0x98] sm:$0xff]
        %v945 = vld [vmem:[%s930 + $0xa8] sm:$0xff]
        %v946 = vld [vmem:[%s930 + $0xb0] sm:$0xff]
        %v947 = vpack.c.bf16 %v932, %v931
        %v948 = vpack.c.bf16 %v934, %v933
        %v949 = vpack.c.bf16 %v936, %v935
        %v950 = vpack.c.bf16 %v938, %v937
        %v951 = vpack.c.bf16 %v940, %v939
        %v952 = vpack.c.bf16 %v942, %v941
        %v953 = vpack.c.bf16 %v944, %v943
        %v954 = vpack.c.bf16 %v946, %v945
        %955 = vst [vmem:[#allocation3 + $0x18] sm:$0xff] %v947
        %956 = vst [vmem:[#allocation3 + $0x60] sm:$0xff] %v948
        %957 = vst [vmem:[#allocation3 + $0xa8] sm:$0xff] %v949
        %958 = vst [vmem:[#allocation3 + $0xf0] sm:$0xff] %v950
        %959 = vst [vmem:[#allocation3 + $0x138] sm:$0xff] %v951
        %960 = vst [vmem:[#allocation3 + $0x180] sm:$0xff] %v952
        %961 = vst [vmem:[#allocation3 + $0x1c8] sm:$0xff] %v953
        %962 = vst [vmem:[#allocation3 + $0x210] sm:$0xff] %v954
        %v963 = vld [vmem:[%s930 + $0x1] sm:$0xff]
        %v964 = vld [vmem:[%s930 + $0x9] sm:$0xff]
        %v965 = vld [vmem:[%s930 + $0x19] sm:$0xff]
        %v966 = vld [vmem:[%s930 + $0x21] sm:$0xff]
        %v967 = vld [vmem:[%s930 + $0x31] sm:$0xff]
        %v968 = vld [vmem:[%s930 + $0x39] sm:$0xff]
        %v969 = vld [vmem:[%s930 + $0x49] sm:$0xff]
        %v970 = vld [vmem:[%s930 + $0x51] sm:$0xff]
        %v971 = vld [vmem:[%s930 + $0x61] sm:$0xff]
        %v972 = vld [vmem:[%s930 + $0x69] sm:$0xff]
        %v973 = vld [vmem:[%s930 + $0x79] sm:$0xff]
        %v974 = vld [vmem:[%s930 + $0x81] sm:$0xff]
        %v975 = vld [vmem:[%s930 + $0x91] sm:$0xff]
        %v976 = vld [vmem:[%s930 + $0x99] sm:$0xff]
        %v977 = vld [vmem:[%s930 + $0xa9] sm:$0xff]
        %v978 = vld [vmem:[%s930 + $0xb1] sm:$0xff]
        %v979 = vpack.c.bf16 %v964, %v963
        %v980 = vpack.c.bf16 %v966, %v965
        %v981 = vpack.c.bf16 %v968, %v967
        %v982 = vpack.c.bf16 %v970, %v969
        %v983 = vpack.c.bf16 %v972, %v971
        %v984 = vpack.c.bf16 %v974, %v973
        %v985 = vpack.c.bf16 %v976, %v975
        %v986 = vpack.c.bf16 %v978, %v977
        %987 = vst [vmem:[#allocation3 + $0x20] sm:$0xff] %v979
        %988 = vst [vmem:[#allocation3 + $0x68] sm:$0xff] %v980
        %989 = vst [vmem:[#allocation3 + $0xb0] sm:$0xff] %v981
        %990 = vst [vmem:[#allocation3 + $0xf8] sm:$0xff] %v982
        %991 = vst [vmem:[#allocation3 + $0x140] sm:$0xff] %v983
        %992 = vst [vmem:[#allocation3 + $0x188] sm:$0xff] %v984
        %993 = vst [vmem:[#allocation3 + $0x1d0] sm:$0xff] %v985
        %994 = vst [vmem:[#allocation3 + $0x218] sm:$0xff] %v986
        %v995 = vld [vmem:[%s930 + $0x2] sm:$0xff]
        %v996 = vld [vmem:[%s930 + $0xa] sm:$0xff]
        %v997 = vld [vmem:[%s930 + $0x1a] sm:$0xff]
        %v998 = vld [vmem:[%s930 + $0x22] sm:$0xff]
        %v999 = vld [vmem:[%s930 + $0x32] sm:$0xff]
        %v1000 = vld [vmem:[%s930 + $0x3a] sm:$0xff]
        %v1001 = vld [vmem:[%s930 + $0x4a] sm:$0xff]
        %v1002 = vld [vmem:[%s930 + $0x52] sm:$0xff]
        %v1003 = vld [vmem:[%s930 + $0x62] sm:$0xff]
        %v1004 = vld [vmem:[%s930 + $0x6a] sm:$0xff]
        %v1005 = vld [vmem:[%s930 + $0x7a] sm:$0xff]
        %v1006 = vld [vmem:[%s930 + $0x82] sm:$0xff]
        %v1007 = vld [vmem:[%s930 + $0x92] sm:$0xff]
        %v1008 = vld [vmem:[%s930 + $0x9a] sm:$0xff]
        %v1009 = vld [vmem:[%s930 + $0xaa] sm:$0xff]
        %v1010 = vld [vmem:[%s930 + $0xb2] sm:$0xff]
        %v1011 = vpack.c.bf16 %v996, %v995
        %v1012 = vpack.c.bf16 %v998, %v997
        %v1013 = vpack.c.bf16 %v1000, %v999
        %v1014 = vpack.c.bf16 %v1002, %v1001
        %v1015 = vpack.c.bf16 %v1004, %v1003
        %v1016 = vpack.c.bf16 %v1006, %v1005
        %v1017 = vpack.c.bf16 %v1008, %v1007
        %v1018 = vpack.c.bf16 %v1010, %v1009
        %1019 = vst [vmem:[#allocation3 + $0x28] sm:$0xff] %v1011
        %1020 = vst [vmem:[#allocation3 + $0x70] sm:$0xff] %v1012
        %1021 = vst [vmem:[#allocation3 + $0xb8] sm:$0xff] %v1013
        %1022 = vst [vmem:[#allocation3 + $0x100] sm:$0xff] %v1014
        %1023 = vst [vmem:[#allocation3 + $0x148] sm:$0xff] %v1015
        %1024 = vst [vmem:[#allocation3 + $0x190] sm:$0xff] %v1016
        %1025 = vst [vmem:[#allocation3 + $0x1d8] sm:$0xff] %v1017
        %1026 = vst [vmem:[#allocation3 + $0x220] sm:$0xff] %v1018
        %s1027 = sadd.s32 %s829, 2
        %s1028 = smul.u32 %s1027, 24
        %s1029 = scalar_lea.vmem [#allocation2], %s1028
        %v1030 = vld [vmem:[%s1029] sm:$0xff]
        %v1031 = vld [vmem:[%s1029 + $0x8] sm:$0xff]
        %v1032 = vld [vmem:[%s1029 + $0x18] sm:$0xff]
        %v1033 = vld [vmem:[%s1029 + $0x20] sm:$0xff]
        %v1034 = vld [vmem:[%s1029 + $0x30] sm:$0xff]
        %v1035 = vld [vmem:[%s1029 + $0x38] sm:$0xff]
        %v1036 = vld [vmem:[%s1029 + $0x48] sm:$0xff]
        %v1037 = vld [vmem:[%s1029 + $0x50] sm:$0xff]
        %v1038 = vld [vmem:[%s1029 + $0x60] sm:$0xff]
        %v1039 = vld [vmem:[%s1029 + $0x68] sm:$0xff]
        %v1040 = vld [vmem:[%s1029 + $0x78] sm:$0xff]
        %v1041 = vld [vmem:[%s1029 + $0x80] sm:$0xff]
        %v1042 = vld [vmem:[%s1029 + $0x90] sm:$0xff]
        %v1043 = vld [vmem:[%s1029 + $0x98] sm:$0xff]
        %v1044 = vld [vmem:[%s1029 + $0xa8] sm:$0xff]
        %v1045 = vld [vmem:[%s1029 + $0xb0] sm:$0xff]
        %v1046 = vpack.c.bf16 %v1031, %v1030
        %v1047 = vpack.c.bf16 %v1033, %v1032
        %v1048 = vpack.c.bf16 %v1035, %v1034
        %v1049 = vpack.c.bf16 %v1037, %v1036
        %v1050 = vpack.c.bf16 %v1039, %v1038
        %v1051 = vpack.c.bf16 %v1041, %v1040
        %v1052 = vpack.c.bf16 %v1043, %v1042
        %v1053 = vpack.c.bf16 %v1045, %v1044
        %1054 = vst [vmem:[#allocation3 + $0x30] sm:$0xff] %v1046
        %1055 = vst [vmem:[#allocation3 + $0x78] sm:$0xff] %v1047
        %1056 = vst [vmem:[#allocation3 + $0xc0] sm:$0xff] %v1048
        %1057 = vst [vmem:[#allocation3 + $0x108] sm:$0xff] %v1049
        %1058 = vst [vmem:[#allocation3 + $0x150] sm:$0xff] %v1050
        %1059 = vst [vmem:[#allocation3 + $0x198] sm:$0xff] %v1051
        %1060 = vst [vmem:[#allocation3 + $0x1e0] sm:$0xff] %v1052
        %1061 = vst [vmem:[#allocation3 + $0x228] sm:$0xff] %v1053
        %v1062 = vld [vmem:[%s1029 + $0x1] sm:$0xff]
        %v1063 = vld [vmem:[%s1029 + $0x9] sm:$0xff]
        %v1064 = vld [vmem:[%s1029 + $0x19] sm:$0xff]
        %v1065 = vld [vmem:[%s1029 + $0x21] sm:$0xff]
        %v1066 = vld [vmem:[%s1029 + $0x31] sm:$0xff]
        %v1067 = vld [vmem:[%s1029 + $0x39] sm:$0xff]
        %v1068 = vld [vmem:[%s1029 + $0x49] sm:$0xff]
        %v1069 = vld [vmem:[%s1029 + $0x51] sm:$0xff]
        %v1070 = vld [vmem:[%s1029 + $0x61] sm:$0xff]
        %v1071 = vld [vmem:[%s1029 + $0x69] sm:$0xff]
        %v1072 = vld [vmem:[%s1029 + $0x79] sm:$0xff]
        %v1073 = vld [vmem:[%s1029 + $0x81] sm:$0xff]
        %v1074 = vld [vmem:[%s1029 + $0x91] sm:$0xff]
        %v1075 = vld [vmem:[%s1029 + $0x99] sm:$0xff]
        %v1076 = vld [vmem:[%s1029 + $0xa9] sm:$0xff]
        %v1077 = vld [vmem:[%s1029 + $0xb1] sm:$0xff]
        %v1078 = vpack.c.bf16 %v1063, %v1062
        %v1079 = vpack.c.bf16 %v1065, %v1064
        %v1080 = vpack.c.bf16 %v1067, %v1066
        %v1081 = vpack.c.bf16 %v1069, %v1068
        %v1082 = vpack.c.bf16 %v1071, %v1070
        %v1083 = vpack.c.bf16 %v1073, %v1072
        %v1084 = vpack.c.bf16 %v1075, %v1074
        %v1085 = vpack.c.bf16 %v1077, %v1076
        %1086 = vst [vmem:[#allocation3 + $0x38] sm:$0xff] %v1078
        %1087 = vst [vmem:[#allocation3 + $0x80] sm:$0xff] %v1079
        %1088 = vst [vmem:[#allocation3 + $0xc8] sm:$0xff] %v1080
        %1089 = vst [vmem:[#allocation3 + $0x110] sm:$0xff] %v1081
        %1090 = vst [vmem:[#allocation3 + $0x158] sm:$0xff] %v1082
        %1091 = vst [vmem:[#allocation3 + $0x1a0] sm:$0xff] %v1083
        %1092 = vst [vmem:[#allocation3 + $0x1e8] sm:$0xff] %v1084
        %1093 = vst [vmem:[#allocation3 + $0x230] sm:$0xff] %v1085
        %v1094 = vld [vmem:[%s1029 + $0x2] sm:$0xff]
        %v1095 = vld [vmem:[%s1029 + $0xa] sm:$0xff]
        %v1096 = vld [vmem:[%s1029 + $0x1a] sm:$0xff]
        %v1097 = vld [vmem:[%s1029 + $0x22] sm:$0xff]
        %v1098 = vld [vmem:[%s1029 + $0x32] sm:$0xff]
        %v1099 = vld [vmem:[%s1029 + $0x3a] sm:$0xff]
        %v1100 = vld [vmem:[%s1029 + $0x4a] sm:$0xff]
        %v1101 = vld [vmem:[%s1029 + $0x52] sm:$0xff]
        %v1102 = vld [vmem:[%s1029 + $0x62] sm:$0xff]
        %v1103 = vld [vmem:[%s1029 + $0x6a] sm:$0xff]
        %v1104 = vld [vmem:[%s1029 + $0x7a] sm:$0xff]
        %v1105 = vld [vmem:[%s1029 + $0x82] sm:$0xff]
        %v1106 = vld [vmem:[%s1029 + $0x92] sm:$0xff]
        %v1107 = vld [vmem:[%s1029 + $0x9a] sm:$0xff]
        %v1108 = vld [vmem:[%s1029 + $0xaa] sm:$0xff]
        %v1109 = vld [vmem:[%s1029 + $0xb2] sm:$0xff]
        %v1110 = vpack.c.bf16 %v1095, %v1094
        %v1111 = vpack.c.bf16 %v1097, %v1096
        %v1112 = vpack.c.bf16 %v1099, %v1098
        %v1113 = vpack.c.bf16 %v1101, %v1100
        %v1114 = vpack.c.bf16 %v1103, %v1102
        %v1115 = vpack.c.bf16 %v1105, %v1104
        %v1116 = vpack.c.bf16 %v1107, %v1106
        %v1117 = vpack.c.bf16 %v1109, %v1108
        %1118 = vst [vmem:[#allocation3 + $0x40] sm:$0xff] %v1110
        %1119 = vst [vmem:[#allocation3 + $0x88] sm:$0xff] %v1111
        %1120 = vst [vmem:[#allocation3 + $0xd0] sm:$0xff] %v1112
        %1121 = vst [vmem:[#allocation3 + $0x118] sm:$0xff] %v1113
        %1122 = vst [vmem:[#allocation3 + $0x160] sm:$0xff] %v1114
        %1123 = vst [vmem:[#allocation3 + $0x1a8] sm:$0xff] %v1115
        %1124 = vst [vmem:[#allocation3 + $0x1f0] sm:$0xff] %v1116
        %1125 = vst [vmem:[#allocation3 + $0x238] sm:$0xff] %v1117
        %v1126 = vld [vmem:[#allocation3] sm:$0xff]
        %v1127 = vld [vmem:[#allocation3 + $0x8] sm:$0xff]
        %v1128 = vld [vmem:[#allocation3 + $0x10] sm:$0xff]
        %v1129 = vld [vmem:[#allocation3 + $0x18] sm:$0xff]
        %v1130 = vld [vmem:[#allocation3 + $0x20] sm:$0xff]
        %v1131 = vld [vmem:[#allocation3 + $0x28] sm:$0xff]
        %v1132 = vld [vmem:[#allocation3 + $0x30] sm:$0xff]
        %v1133 = vld [vmem:[#allocation3 + $0x38] sm:$0xff]
        %v1134 = vld [vmem:[#allocation3 + $0x40] sm:$0xff]
        %v1135 = vld [vmem:[#allocation3 + $0x48] sm:$0xff]
        %v1136 = vld [vmem:[#allocation3 + $0x50] sm:$0xff]
        %v1137 = vld [vmem:[#allocation3 + $0x58] sm:$0xff]
        %v1138 = vld [vmem:[#allocation3 + $0x60] sm:$0xff]
        %v1139 = vld [vmem:[#allocation3 + $0x68] sm:$0xff]
        %v1140 = vld [vmem:[#allocation3 + $0x70] sm:$0xff]
        %v1141 = vld [vmem:[#allocation3 + $0x78] sm:$0xff]
        %v1142 = vld [vmem:[#allocation3 + $0x80] sm:$0xff]
        %v1143 = vld [vmem:[#allocation3 + $0x88] sm:$0xff]
        %v1144 = vld [vmem:[#allocation3 + $0x90] sm:$0xff]
        %v1145 = vld [vmem:[#allocation3 + $0x98] sm:$0xff]
        %v1146 = vld [vmem:[#allocation3 + $0xa0] sm:$0xff]
        %v1147 = vld [vmem:[#allocation3 + $0xa8] sm:$0xff]
        %v1148 = vld [vmem:[#allocation3 + $0xb0] sm:$0xff]
        %v1149 = vld [vmem:[#allocation3 + $0xb8] sm:$0xff]
        %v1150 = vld [vmem:[#allocation3 + $0xc0] sm:$0xff]
        %v1151 = vld [vmem:[#allocation3 + $0xc8] sm:$0xff]
        %v1152 = vld [vmem:[#allocation3 + $0xd0] sm:$0xff]
        %v1153 = vld [vmem:[#allocation3 + $0xd8] sm:$0xff]
        %v1154 = vld [vmem:[#allocation3 + $0xe0] sm:$0xff]
        %v1155 = vld [vmem:[#allocation3 + $0xe8] sm:$0xff]
        %v1156 = vld [vmem:[#allocation3 + $0xf0] sm:$0xff]
        %v1157 = vld [vmem:[#allocation3 + $0xf8] sm:$0xff]
        %v1158 = vld [vmem:[#allocation3 + $0x100] sm:$0xff]
        %v1159 = vld [vmem:[#allocation3 + $0x108] sm:$0xff]
        %v1160 = vld [vmem:[#allocation3 + $0x110] sm:$0xff]
        %v1161 = vld [vmem:[#allocation3 + $0x118] sm:$0xff]
        %v1162 = vld [vmem:[#allocation3 + $0x120] sm:$0xff]
        %v1163 = vld [vmem:[#allocation3 + $0x128] sm:$0xff]
        %v1164 = vld [vmem:[#allocation3 + $0x130] sm:$0xff]
        %v1165 = vld [vmem:[#allocation3 + $0x138] sm:$0xff]
        %v1166 = vld [vmem:[#allocation3 + $0x140] sm:$0xff]
        %v1167 = vld [vmem:[#allocation3 + $0x148] sm:$0xff]
        %v1168 = vld [vmem:[#allocation3 + $0x150] sm:$0xff]
        %v1169 = vld [vmem:[#allocation3 + $0x158] sm:$0xff]
        %v1170 = vld [vmem:[#allocation3 + $0x160] sm:$0xff]
        %v1171 = vld [vmem:[#allocation3 + $0x168] sm:$0xff]
        %v1172 = vld [vmem:[#allocation3 + $0x170] sm:$0xff]
        %v1173 = vld [vmem:[#allocation3 + $0x178] sm:$0xff]
        %v1174 = vld [vmem:[#allocation3 + $0x180] sm:$0xff]
        %v1175 = vld [vmem:[#allocation3 + $0x188] sm:$0xff]
        %v1176 = vld [vmem:[#allocation3 + $0x190] sm:$0xff]
        %v1177 = vld [vmem:[#allocation3 + $0x198] sm:$0xff]
        %v1178 = vld [vmem:[#allocation3 + $0x1a0] sm:$0xff]
        %v1179 = vld [vmem:[#allocation3 + $0x1a8] sm:$0xff]
        %v1180 = vld [vmem:[#allocation3 + $0x1b0] sm:$0xff]
        %v1181 = vld [vmem:[#allocation3 + $0x1b8] sm:$0xff]
        %v1182 = vld [vmem:[#allocation3 + $0x1c0] sm:$0xff]
        %v1183 = vld [vmem:[#allocation3 + $0x1c8] sm:$0xff]
        %v1184 = vld [vmem:[#allocation3 + $0x1d0] sm:$0xff]
        %v1185 = vld [vmem:[#allocation3 + $0x1d8] sm:$0xff]
        %v1186 = vld [vmem:[#allocation3 + $0x1e0] sm:$0xff]
        %v1187 = vld [vmem:[#allocation3 + $0x1e8] sm:$0xff]
        %v1188 = vld [vmem:[#allocation3 + $0x1f0] sm:$0xff]
        %v1189 = vld [vmem:[#allocation3 + $0x1f8] sm:$0xff]
        %v1190 = vld [vmem:[#allocation3 + $0x200] sm:$0xff]
        %v1191 = vld [vmem:[#allocation3 + $0x208] sm:$0xff]
        %v1192 = vld [vmem:[#allocation3 + $0x210] sm:$0xff]
        %v1193 = vld [vmem:[#allocation3 + $0x218] sm:$0xff]
        %v1194 = vld [vmem:[#allocation3 + $0x220] sm:$0xff]
        %v1195 = vld [vmem:[#allocation3 + $0x228] sm:$0xff]
        %v1196 = vld [vmem:[#allocation3 + $0x230] sm:$0xff]
        %v1197 = vld [vmem:[#allocation3 + $0x238] sm:$0xff]
        %v1198 = vld [vmem:[#allocation9] sm:$0xf]
        %v1199 = vld [vmem:[#allocation9 + $0x4] sm:$0xf]
        %v1200 = vld [vmem:[#allocation9 + $0x8] sm:$0xf]
        %v1201 = vld [vmem:[#allocation9 + $0xc] sm:$0xf]
        %v1202 = vld [vmem:[#allocation9 + $0x10] sm:$0xf]
        %v1203 = vld [vmem:[#allocation9 + $0x14] sm:$0xf]
        %v1204 = vld [vmem:[#allocation9 + $0x18] sm:$0xf]
        %v1205 = vld [vmem:[#allocation9 + $0x1c] sm:$0xf]
        %v1206 = vld [vmem:[#allocation9 + $0x20] sm:$0xf]
        %v1207 = vld [vmem:[#allocation9 + $0x24] sm:$0xf]
        %v1208 = vld [vmem:[#allocation9 + $0x28] sm:$0xf]
        %v1209 = vld [vmem:[#allocation9 + $0x2c] sm:$0xf]
        %v1210 = vld [vmem:[#allocation9 + $0x30] sm:$0xf]
        %v1211 = vld [vmem:[#allocation9 + $0x34] sm:$0xf]
        %v1212 = vld [vmem:[#allocation9 + $0x38] sm:$0xf]
        %v1213 = vld [vmem:[#allocation9 + $0x3c] sm:$0xf]
        %v1214 = vld [vmem:[#allocation9 + $0x40] sm:$0xf]
        %v1215 = vld [vmem:[#allocation9 + $0x44] sm:$0xf]
        %v1216 = vld [vmem:[#allocation9 + $0x48] sm:$0xf]
        %v1217 = vld [vmem:[#allocation9 + $0x4c] sm:$0xf]
        %v1218 = vld [vmem:[#allocation9 + $0x50] sm:$0xf]
        %v1219 = vld [vmem:[#allocation9 + $0x54] sm:$0xf]
        %v1220 = vld [vmem:[#allocation9 + $0x58] sm:$0xf]
        %v1221 = vld [vmem:[#allocation9 + $0x5c] sm:$0xf]
        %v1222 = vld [vmem:[#allocation9 + $0x60] sm:$0xf]
        %v1223 = vld [vmem:[#allocation9 + $0x64] sm:$0xf]
        %v1224 = vld [vmem:[#allocation9 + $0x68] sm:$0xf]
        %v1225 = vld [vmem:[#allocation9 + $0x6c] sm:$0xf]
        %v1226 = vld [vmem:[#allocation9 + $0x70] sm:$0xf]
        %v1227 = vld [vmem:[#allocation9 + $0x74] sm:$0xf]
        %v1228 = vld [vmem:[#allocation9 + $0x78] sm:$0xf]
        %v1229 = vld [vmem:[#allocation9 + $0x7c] sm:$0xf]
        %v1230 = vld [vmem:[#allocation9 + $0x80] sm:$0xf]
        %v1231 = vld [vmem:[#allocation9 + $0x84] sm:$0xf]
        %v1232 = vld [vmem:[#allocation9 + $0x88] sm:$0xf]
        %v1233 = vld [vmem:[#allocation9 + $0x8c] sm:$0xf]
        %v1234 = vld [vmem:[#allocation9 + $0x90] sm:$0xf]
        %v1235 = vld [vmem:[#allocation9 + $0x94] sm:$0xf]
        %v1236 = vld [vmem:[#allocation9 + $0x98] sm:$0xf]
        %v1237 = vld [vmem:[#allocation9 + $0x9c] sm:$0xf]
        %v1238 = vld [vmem:[#allocation9 + $0xa0] sm:$0xf]
        %v1239 = vld [vmem:[#allocation9 + $0xa4] sm:$0xf]
        %v1240 = vld [vmem:[#allocation9 + $0xa8] sm:$0xf]
        %v1241 = vld [vmem:[#allocation9 + $0xac] sm:$0xf]
        %v1242 = vld [vmem:[#allocation9 + $0xb0] sm:$0xf]
        %v1243 = vld [vmem:[#allocation9 + $0xb4] sm:$0xf]
        %v1244 = vld [vmem:[#allocation9 + $0xb8] sm:$0xf]
        %v1245 = vld [vmem:[#allocation9 + $0xbc] sm:$0xf]
        %v1246 = vld [vmem:[#allocation9 + $0xc0] sm:$0xf]
        %v1247 = vld [vmem:[#allocation9 + $0xc4] sm:$0xf]
        %v1248 = vld [vmem:[#allocation9 + $0xc8] sm:$0xf]
        %v1249 = vld [vmem:[#allocation9 + $0xcc] sm:$0xf]
        %v1250 = vld [vmem:[#allocation9 + $0xd0] sm:$0xf]
        %v1251 = vld [vmem:[#allocation9 + $0xd4] sm:$0xf]
        %v1252 = vld [vmem:[#allocation9 + $0xd8] sm:$0xf]
        %v1253 = vld [vmem:[#allocation9 + $0xdc] sm:$0xf]
        %v1254 = vld [vmem:[#allocation9 + $0xe0] sm:$0xf]
        %v1255 = vld [vmem:[#allocation9 + $0xe4] sm:$0xf]
        %v1256 = vld [vmem:[#allocation9 + $0xe8] sm:$0xf]
        %v1257 = vld [vmem:[#allocation9 + $0xec] sm:$0xf]
        %v1258 = vld [vmem:[#allocation9 + $0xf0] sm:$0xf]
        %v1259 = vld [vmem:[#allocation9 + $0xf4] sm:$0xf]
        %v1260 = vld [vmem:[#allocation9 + $0xf8] sm:$0xf]
        %v1261 = vld [vmem:[#allocation9 + $0xfc] sm:$0xf]
        %v1262 = vld [vmem:[#allocation9 + $0x100] sm:$0xf]
        %v1263 = vld [vmem:[#allocation9 + $0x104] sm:$0xf]
        %v1264 = vld [vmem:[#allocation9 + $0x108] sm:$0xf]
        %v1265 = vld [vmem:[#allocation9 + $0x10c] sm:$0xf]
        %v1266 = vld [vmem:[#allocation9 + $0x110] sm:$0xf]
        %v1267 = vld [vmem:[#allocation9 + $0x114] sm:$0xf]
        %v1268 = vld [vmem:[#allocation9 + $0x118] sm:$0xf]
        %v1269 = vld [vmem:[#allocation9 + $0x11c] sm:$0xf]
        %v1270 = vld [vmem:[#allocation9 + $0x120] sm:$0xf]
        %v1271 = vld [vmem:[#allocation9 + $0x124] sm:$0xf]
        %v1272 = vld [vmem:[#allocation9 + $0x128] sm:$0xf]
        %v1273 = vld [vmem:[#allocation9 + $0x12c] sm:$0xf]
        %v1274 = vld [vmem:[#allocation9 + $0x130] sm:$0xf]
        %v1275 = vld [vmem:[#allocation9 + $0x134] sm:$0xf]
        %v1276 = vld [vmem:[#allocation9 + $0x138] sm:$0xf]
        %v1277 = vld [vmem:[#allocation9 + $0x13c] sm:$0xf]
        %v1278 = vld [vmem:[#allocation9 + $0x140] sm:$0xf]
        %v1279 = vld [vmem:[#allocation9 + $0x144] sm:$0xf]
        %v1280 = vld [vmem:[#allocation9 + $0x148] sm:$0xf]
        %v1281 = vld [vmem:[#allocation9 + $0x14c] sm:$0xf]
        %v1282 = vld [vmem:[#allocation9 + $0x150] sm:$0xf]
        %v1283 = vld [vmem:[#allocation9 + $0x154] sm:$0xf]
        %v1284 = vld [vmem:[#allocation9 + $0x158] sm:$0xf]
        %v1285 = vld [vmem:[#allocation9 + $0x15c] sm:$0xf]
        %v1286 = vld [vmem:[#allocation9 + $0x160] sm:$0xf]
        %v1287 = vld [vmem:[#allocation9 + $0x164] sm:$0xf]
        %v1288 = vld [vmem:[#allocation9 + $0x168] sm:$0xf]
        %v1289 = vld [vmem:[#allocation9 + $0x16c] sm:$0xf]
        %v1290 = vld [vmem:[#allocation9 + $0x170] sm:$0xf]
        %v1291 = vld [vmem:[#allocation9 + $0x174] sm:$0xf]
        %v1292 = vld [vmem:[#allocation9 + $0x178] sm:$0xf]
        %v1293 = vld [vmem:[#allocation9 + $0x17c] sm:$0xf]
        %v1294 = vld [vmem:[#allocation9 + $0x180] sm:$0xf]
        %v1295 = vld [vmem:[#allocation9 + $0x184] sm:$0xf]
        %v1296 = vld [vmem:[#allocation9 + $0x188] sm:$0xf]
        %v1297 = vld [vmem:[#allocation9 + $0x18c] sm:$0xf]
        %v1298 = vld [vmem:[#allocation9 + $0x190] sm:$0xf]
        %v1299 = vld [vmem:[#allocation9 + $0x194] sm:$0xf]
        %v1300 = vld [vmem:[#allocation9 + $0x198] sm:$0xf]
        %v1301 = vld [vmem:[#allocation9 + $0x19c] sm:$0xf]
        %v1302 = vld [vmem:[#allocation9 + $0x1a0] sm:$0xf]
        %v1303 = vld [vmem:[#allocation9 + $0x1a4] sm:$0xf]
        %v1304 = vld [vmem:[#allocation9 + $0x1a8] sm:$0xf]
        %v1305 = vld [vmem:[#allocation9 + $0x1ac] sm:$0xf]
        %v1306 = vld [vmem:[#allocation9 + $0x1b0] sm:$0xf]
        %v1307 = vld [vmem:[#allocation9 + $0x1b4] sm:$0xf]
        %v1308 = vld [vmem:[#allocation9 + $0x1b8] sm:$0xf]
        %v1309 = vld [vmem:[#allocation9 + $0x1bc] sm:$0xf]
        %v1310 = vld [vmem:[#allocation9 + $0x1c0] sm:$0xf]
        %v1311 = vld [vmem:[#allocation9 + $0x1c4] sm:$0xf]
        %v1312 = vld [vmem:[#allocation9 + $0x1c8] sm:$0xf]
        %v1313 = vld [vmem:[#allocation9 + $0x1cc] sm:$0xf]
        %v1314 = vld [vmem:[#allocation9 + $0x1d0] sm:$0xf]
        %v1315 = vld [vmem:[#allocation9 + $0x1d4] sm:$0xf]
        %v1316 = vld [vmem:[#allocation9 + $0x1d8] sm:$0xf]
        %v1317 = vld [vmem:[#allocation9 + $0x1dc] sm:$0xf]
        %v1318 = vld [vmem:[#allocation9 + $0x1e0] sm:$0xf]
        %v1319 = vld [vmem:[#allocation9 + $0x1e4] sm:$0xf]
        %v1320 = vld [vmem:[#allocation9 + $0x1e8] sm:$0xf]
        %v1321 = vld [vmem:[#allocation9 + $0x1ec] sm:$0xf]
        %v1322 = vld [vmem:[#allocation9 + $0x1f0] sm:$0xf]
        %v1323 = vld [vmem:[#allocation9 + $0x1f4] sm:$0xf]
        %v1324 = vld [vmem:[#allocation9 + $0x1f8] sm:$0xf]
        %v1325 = vld [vmem:[#allocation9 + $0x1fc] sm:$0xf]
        %v1326 = vld [vmem:[#allocation9 + $0x200] sm:$0xf]
        %v1327 = vld [vmem:[#allocation9 + $0x204] sm:$0xf]
        %v1328 = vld [vmem:[#allocation9 + $0x208] sm:$0xf]
        %v1329 = vld [vmem:[#allocation9 + $0x20c] sm:$0xf]
        %v1330 = vld [vmem:[#allocation9 + $0x210] sm:$0xf]
        %v1331 = vld [vmem:[#allocation9 + $0x214] sm:$0xf]
        %v1332 = vld [vmem:[#allocation9 + $0x218] sm:$0xf]
        %v1333 = vld [vmem:[#allocation9 + $0x21c] sm:$0xf]
        %v1334 = vld [vmem:[#allocation9 + $0x220] sm:$0xf]
        %v1335 = vld [vmem:[#allocation9 + $0x224] sm:$0xf]
        %v1336 = vld [vmem:[#allocation9 + $0x228] sm:$0xf]
        %v1337 = vld [vmem:[#allocation9 + $0x22c] sm:$0xf]
        %v1338 = vld [vmem:[#allocation9 + $0x230] sm:$0xf]
        %v1339 = vld [vmem:[#allocation9 + $0x234] sm:$0xf]
        %v1340 = vld [vmem:[#allocation9 + $0x238] sm:$0xf]
        %v1341 = vld [vmem:[#allocation9 + $0x23c] sm:$0xf]
        %v1342 = vld [vmem:[%s4] sm:$0x1]
        %v1344 = vlaneseq
        %v1345 = vshrl.u32 %v1344, 7
        %v1346 = vsub.s32 0, %v1345
        %v1347 = vrot.slane %v1342, %v1346
        %v1493 = vunpack.c.l.b16 %v1198
        %v1494 = vunpack.c.l.b16 %v1199
        %v1495 = vunpack.c.l.b16 %v1200
        %v1496 = vunpack.c.l.b16 %v1201
        %v1497 = vunpack.c.l.b16 %v1202
        %v1498 = vunpack.c.l.b16 %v1203
        %v1499 = vunpack.c.l.b16 %v1204
        %v1500 = vunpack.c.l.b16 %v1205
        %v1501 = vunpack.c.l.b16 %v1206
        %v1502 = vunpack.c.l.b16 %v1207
        %v1503 = vunpack.c.l.b16 %v1208
        %v1504 = vunpack.c.l.b16 %v1209
        %v1505 = vunpack.c.l.b16 %v1210
        %v1506 = vunpack.c.l.b16 %v1211
        %v1507 = vunpack.c.l.b16 %v1212
        %v1508 = vunpack.c.l.b16 %v1213
        %v1509 = vunpack.c.l.b16 %v1214
        %v1510 = vunpack.c.l.b16 %v1215
        %v1511 = vunpack.c.l.b16 %v1216
        %v1512 = vunpack.c.l.b16 %v1217
        %v1513 = vunpack.c.l.b16 %v1218
        %v1514 = vunpack.c.l.b16 %v1219
        %v1515 = vunpack.c.l.b16 %v1220
        %v1516 = vunpack.c.l.b16 %v1221
        %v1517 = vunpack.c.l.b16 %v1222
        %v1518 = vunpack.c.l.b16 %v1223
        %v1519 = vunpack.c.l.b16 %v1224
        %v1520 = vunpack.c.l.b16 %v1225
        %v1521 = vunpack.c.l.b16 %v1226
        %v1522 = vunpack.c.l.b16 %v1227
        %v1523 = vunpack.c.l.b16 %v1228
        %v1524 = vunpack.c.l.b16 %v1229
        %v1525 = vunpack.c.l.b16 %v1230
        %v1526 = vunpack.c.l.b16 %v1231
        %v1527 = vunpack.c.l.b16 %v1232
        %v1528 = vunpack.c.l.b16 %v1233
        %v1529 = vunpack.c.l.b16 %v1234
        %v1530 = vunpack.c.l.b16 %v1235
        %v1531 = vunpack.c.l.b16 %v1236
        %v1532 = vunpack.c.l.b16 %v1237
        %v1533 = vunpack.c.l.b16 %v1238
        %v1534 = vunpack.c.l.b16 %v1239
        %v1535 = vunpack.c.l.b16 %v1240
        %v1536 = vunpack.c.l.b16 %v1241
        %v1537 = vunpack.c.l.b16 %v1242
        %v1538 = vunpack.c.l.b16 %v1243
        %v1539 = vunpack.c.l.b16 %v1244
        %v1540 = vunpack.c.l.b16 %v1245
        %v1541 = vunpack.c.l.b16 %v1246
        %v1542 = vunpack.c.l.b16 %v1247
        %v1543 = vunpack.c.l.b16 %v1248
        %v1544 = vunpack.c.l.b16 %v1249
        %v1545 = vunpack.c.l.b16 %v1250
        %v1546 = vunpack.c.l.b16 %v1251
        %v1547 = vunpack.c.l.b16 %v1252
        %v1548 = vunpack.c.l.b16 %v1253
        %v1549 = vunpack.c.l.b16 %v1254
        %v1550 = vunpack.c.l.b16 %v1255
        %v1551 = vunpack.c.l.b16 %v1256
        %v1552 = vunpack.c.l.b16 %v1257
        %v1553 = vunpack.c.l.b16 %v1258
        %v1554 = vunpack.c.l.b16 %v1259
        %v1555 = vunpack.c.l.b16 %v1260
        %v1556 = vunpack.c.l.b16 %v1261
        %v1557 = vunpack.c.l.b16 %v1262
        %v1558 = vunpack.c.l.b16 %v1263
        %v1559 = vunpack.c.l.b16 %v1264
        %v1560 = vunpack.c.l.b16 %v1265
        %v1561 = vunpack.c.l.b16 %v1266
        %v1562 = vunpack.c.l.b16 %v1267
        %v1563 = vunpack.c.l.b16 %v1268
        %v1564 = vunpack.c.l.b16 %v1269
        %v1565 = vunpack.c.l.b16 %v1270
        %v1566 = vunpack.c.l.b16 %v1271
        %v1567 = vunpack.c.l.b16 %v1272
        %v1568 = vunpack.c.l.b16 %v1273
        %v1569 = vunpack.c.l.b16 %v1274
        %v1570 = vunpack.c.l.b16 %v1275
        %v1571 = vunpack.c.l.b16 %v1276
        %v1572 = vunpack.c.l.b16 %v1277
        %v1573 = vunpack.c.l.b16 %v1278
        %v1574 = vunpack.c.l.b16 %v1279
        %v1575 = vunpack.c.l.b16 %v1280
        %v1576 = vunpack.c.l.b16 %v1281
        %v1577 = vunpack.c.l.b16 %v1282
        %v1578 = vunpack.c.l.b16 %v1283
        %v1579 = vunpack.c.l.b16 %v1284
        %v1580 = vunpack.c.l.b16 %v1285
        %v1581 = vunpack.c.l.b16 %v1286
        %v1582 = vunpack.c.l.b16 %v1287
        %v1583 = vunpack.c.l.b16 %v1288
        %v1584 = vunpack.c.l.b16 %v1289
        %v1585 = vunpack.c.l.b16 %v1290
        %v1586 = vunpack.c.l.b16 %v1291
        %v1587 = vunpack.c.l.b16 %v1292
        %v1588 = vunpack.c.l.b16 %v1293
        %v1589 = vunpack.c.l.b16 %v1294
        %v1590 = vunpack.c.l.b16 %v1295
        %v1591 = vunpack.c.l.b16 %v1296
        %v1592 = vunpack.c.l.b16 %v1297
        %v1593 = vunpack.c.l.b16 %v1298
        %v1594 = vunpack.c.l.b16 %v1299
        %v1595 = vunpack.c.l.b16 %v1300
        %v1596 = vunpack.c.l.b16 %v1301
        %v1597 = vunpack.c.l.b16 %v1302
        %v1598 = vunpack.c.l.b16 %v1303
        %v1599 = vunpack.c.l.b16 %v1304
        %v1600 = vunpack.c.l.b16 %v1305
        %v1601 = vunpack.c.l.b16 %v1306
        %v1602 = vunpack.c.l.b16 %v1307
        %v1603 = vunpack.c.l.b16 %v1308
        %v1604 = vunpack.c.l.b16 %v1309
        %v1605 = vunpack.c.l.b16 %v1310
        %v1606 = vunpack.c.l.b16 %v1311
        %v1607 = vunpack.c.l.b16 %v1312
        %v1608 = vunpack.c.l.b16 %v1313
        %v1609 = vunpack.c.l.b16 %v1314
        %v1610 = vunpack.c.l.b16 %v1315
        %v1611 = vunpack.c.l.b16 %v1316
        %v1612 = vunpack.c.l.b16 %v1317
        %v1613 = vunpack.c.l.b16 %v1318
        %v1614 = vunpack.c.l.b16 %v1319
        %v1615 = vunpack.c.l.b16 %v1320
        %v1616 = vunpack.c.l.b16 %v1321
        %v1617 = vunpack.c.l.b16 %v1322
        %v1618 = vunpack.c.l.b16 %v1323
        %v1619 = vunpack.c.l.b16 %v1324
        %v1620 = vunpack.c.l.b16 %v1325
        %v1621 = vunpack.c.l.b16 %v1326
        %v1622 = vunpack.c.l.b16 %v1327
        %v1623 = vunpack.c.l.b16 %v1328
        %v1624 = vunpack.c.l.b16 %v1329
        %v1625 = vunpack.c.l.b16 %v1330
        %v1626 = vunpack.c.l.b16 %v1331
        %v1627 = vunpack.c.l.b16 %v1332
        %v1628 = vunpack.c.l.b16 %v1333
        %v1629 = vunpack.c.l.b16 %v1334
        %v1630 = vunpack.c.l.b16 %v1335
        %v1631 = vunpack.c.l.b16 %v1336
        %v1632 = vunpack.c.l.b16 %v1337
        %v1633 = vunpack.c.l.b16 %v1338
        %v1634 = vunpack.c.l.b16 %v1339
        %v1635 = vunpack.c.l.b16 %v1340
        %v1636 = vunpack.c.l.b16 %v1341
        %v1637 = vpack.c.b16 %v1494, %v1493
        %v1638 = vpack.c.b16 %v1496, %v1495
        %v1639 = vpack.c.b16 %v1498, %v1497
        %v1640 = vpack.c.b16 %v1500, %v1499
        %v1641 = vpack.c.b16 %v1502, %v1501
        %v1642 = vpack.c.b16 %v1504, %v1503
        %v1643 = vpack.c.b16 %v1506, %v1505
        %v1644 = vpack.c.b16 %v1508, %v1507
        %v1645 = vpack.c.b16 %v1510, %v1509
        %v1646 = vpack.c.b16 %v1512, %v1511
        %v1647 = vpack.c.b16 %v1514, %v1513
        %v1648 = vpack.c.b16 %v1516, %v1515
        %v1649 = vpack.c.b16 %v1518, %v1517
        %v1650 = vpack.c.b16 %v1520, %v1519
        %v1651 = vpack.c.b16 %v1522, %v1521
        %v1652 = vpack.c.b16 %v1524, %v1523
        %v1653 = vpack.c.b16 %v1526, %v1525
        %v1654 = vpack.c.b16 %v1528, %v1527
        %v1655 = vpack.c.b16 %v1530, %v1529
        %v1656 = vpack.c.b16 %v1532, %v1531
        %v1657 = vpack.c.b16 %v1534, %v1533
        %v1658 = vpack.c.b16 %v1536, %v1535
        %v1659 = vpack.c.b16 %v1538, %v1537
        %v1660 = vpack.c.b16 %v1540, %v1539
        %v1661 = vpack.c.b16 %v1542, %v1541
        %v1662 = vpack.c.b16 %v1544, %v1543
        %v1663 = vpack.c.b16 %v1546, %v1545
        %v1664 = vpack.c.b16 %v1548, %v1547
        %v1665 = vpack.c.b16 %v1550, %v1549
        %v1666 = vpack.c.b16 %v1552, %v1551
        %v1667 = vpack.c.b16 %v1554, %v1553
        %v1668 = vpack.c.b16 %v1556, %v1555
        %v1669 = vpack.c.b16 %v1558, %v1557
        %v1670 = vpack.c.b16 %v1560, %v1559
        %v1671 = vpack.c.b16 %v1562, %v1561
        %v1672 = vpack.c.b16 %v1564, %v1563
        %v1673 = vpack.c.b16 %v1566, %v1565
        %v1674 = vpack.c.b16 %v1568, %v1567
        %v1675 = vpack.c.b16 %v1570, %v1569
        %v1676 = vpack.c.b16 %v1572, %v1571
        %v1677 = vpack.c.b16 %v1574, %v1573
        %v1678 = vpack.c.b16 %v1576, %v1575
        %v1679 = vpack.c.b16 %v1578, %v1577
        %v1680 = vpack.c.b16 %v1580, %v1579
        %v1681 = vpack.c.b16 %v1582, %v1581
        %v1682 = vpack.c.b16 %v1584, %v1583
        %v1683 = vpack.c.b16 %v1586, %v1585
        %v1684 = vpack.c.b16 %v1588, %v1587
        %v1685 = vpack.c.b16 %v1590, %v1589
        %v1686 = vpack.c.b16 %v1592, %v1591
        %v1687 = vpack.c.b16 %v1594, %v1593
        %v1688 = vpack.c.b16 %v1596, %v1595
        %v1689 = vpack.c.b16 %v1598, %v1597
        %v1690 = vpack.c.b16 %v1600, %v1599
        %v1691 = vpack.c.b16 %v1602, %v1601
        %v1692 = vpack.c.b16 %v1604, %v1603
        %v1693 = vpack.c.b16 %v1606, %v1605
        %v1694 = vpack.c.b16 %v1608, %v1607
        %v1695 = vpack.c.b16 %v1610, %v1609
        %v1696 = vpack.c.b16 %v1612, %v1611
        %v1697 = vpack.c.b16 %v1614, %v1613
        %v1698 = vpack.c.b16 %v1616, %v1615
        %v1699 = vpack.c.b16 %v1618, %v1617
        %v1700 = vpack.c.b16 %v1620, %v1619
        %v1701 = vpack.c.b16 %v1622, %v1621
        %v1702 = vpack.c.b16 %v1624, %v1623
        %v1703 = vpack.c.b16 %v1626, %v1625
        %v1704 = vpack.c.b16 %v1628, %v1627
        %v1705 = vpack.c.b16 %v1630, %v1629
        %v1706 = vpack.c.b16 %v1632, %v1631
        %v1707 = vpack.c.b16 %v1634, %v1633
        %v1708 = vpack.c.b16 %v1636, %v1635
        %1781 = vmatprep.subr.bf16.mxu0 0
        %1782 = vmatpush1.bf16.msra.mxu0 %v1637
        %1783 = vmatprep.subr.bf16.mxu0 0
        %1784 = vmatpush1.bf16.msra.mxu0 %v1638
        %1785 = vmatprep.subr.bf16.mxu0 0
        %1786 = vmatpush1.bf16.msra.mxu0 %v1639
        %1787 = vmatprep.subr.bf16.mxu0 0
        %1788 = vmatpush1.bf16.msra.mxu0 %v1640
        %1789 = vmatprep.subr.bf16.mxu0 0
        %1790 = vmatpush1.bf16.msra.mxu0 %v1641
        %1791 = vmatprep.subr.bf16.mxu0 0
        %1792 = vmatpush1.bf16.msra.mxu0 %v1642
        %1793 = vmatprep.subr.bf16.mxu0 0
        %1794 = vmatpush1.bf16.msra.mxu0 %v1643
        %1795 = vmatprep.subr.bf16.mxu0 0
        %1796 = vmatpush1.bf16.msra.mxu0 %v1644
        %1797 = vmatprep.subr.bf16.mxu0 0
        %1798 = vmatpush1.bf16.msra.mxu0 %v1645
        %1799 = vmatprep.subr.bf16.mxu0 0
        %1800 = vmatpush1.bf16.msra.mxu0 %v1646
        %1801 = vmatprep.subr.bf16.mxu0 0
        %1802 = vmatpush1.bf16.msra.mxu0 %v1647
        %1803 = vmatprep.subr.bf16.mxu0 0
        %1804 = vmatpush1.bf16.msra.mxu0 %v1648
        %1805 = vmatprep.subr.bf16.mxu0 0
        %1806 = vmatpush1.bf16.msra.mxu0 %v1649
        %1807 = vmatprep.subr.bf16.mxu0 0
        %1808 = vmatpush1.bf16.msra.mxu0 %v1650
        %1809 = vmatprep.subr.bf16.mxu0 0
        %1810 = vmatpush1.bf16.msra.mxu0 %v1651
        %1811 = vmatprep.subr.bf16.mxu0 0
        %1812 = vmatpush1.bf16.msra.mxu0 %v1652
        %1813 = vmatprep.mubr.bf16.mxu0 %v1127
        %1814 = vmatmul.mubr.bf16.gmra.mrb[0].mxu0 %v1126
        %v1815 = vpop.f32.mrb[0].mxu0
        %v1816 = vadd.f32 %v1347, %v1815
        %v1817 = vpop.f32.mrb[0].mxu0
        %v1818 = vpop.f32.mrb[0].mxu0
        %v1819 = vadd.f32 %v1347, %v1818
        %v1820 = vpop.f32.mrb[0].mxu0
        %1821 = vmatprep.mubr.bf16.mxu0 %v1136
        %1822 = vmatmul.mubr.bf16.gmra.mrb[0].mxu0 %v1135
        %v1823 = vpop.f32.mrb[0].mxu0
        %v1824 = vadd.f32 %v1347, %v1823
        %v1825 = vpop.f32.mrb[0].mxu0
        %v1826 = vpop.f32.mrb[0].mxu0
        %v1827 = vadd.f32 %v1347, %v1826
        %v1828 = vpop.f32.mrb[0].mxu0
        %1829 = vmatprep.mubr.bf16.mxu0 %v1145
        %1830 = vmatmul.mubr.bf16.gmra.mrb[0].mxu0 %v1144
        %v1831 = vpop.f32.mrb[0].mxu0
        %v1832 = vadd.f32 %v1347, %v1831
        %v1833 = vpop.f32.mrb[0].mxu0
        %v1834 = vpop.f32.mrb[0].mxu0
        %v1835 = vadd.f32 %v1347, %v1834
        %v1836 = vpop.f32.mrb[0].mxu0
        %1837 = vmatprep.mubr.bf16.mxu0 %v1154
        %1838 = vmatmul.mubr.bf16.gmra.mrb[0].mxu0 %v1153
        %v1839 = vpop.f32.mrb[0].mxu0
        %v1840 = vadd.f32 %v1347, %v1839
        %v1841 = vpop.f32.mrb[0].mxu0
        %v1842 = vpop.f32.mrb[0].mxu0
        %v1843 = vadd.f32 %v1347, %v1842
        %v1844 = vpop.f32.mrb[0].mxu0
        %1845 = vmatprep.mubr.bf16.mxu0 %v1163
        %1846 = vmatmul.mubr.bf16.gmra.mrb[0].mxu0 %v1162
        %v1847 = vpop.f32.mrb[0].mxu0
        %v1848 = vadd.f32 %v1347, %v1847
        %v1849 = vpop.f32.mrb[0].mxu0
        %v1850 = vpop.f32.mrb[0].mxu0
        %v1851 = vadd.f32 %v1347, %v1850
        %v1852 = vpop.f32.mrb[0].mxu0
        %1853 = vmatprep.mubr.bf16.mxu0 %v1172
        %1854 = vmatmul.mubr.bf16.gmra.mrb[0].mxu0 %v1171
        %v1855 = vpop.f32.mrb[0].mxu0
        %v1856 = vadd.f32 %v1347, %v1855
        %v1857 = vpop.f32.mrb[0].mxu0
        %v1858 = vpop.f32.mrb[0].mxu0
        %v1859 = vadd.f32 %v1347, %v1858
        %v1860 = vpop.f32.mrb[0].mxu0
        %1861 = vmatprep.mubr.bf16.mxu0 %v1181
        %1862 = vmatmul.mubr.bf16.gmra.mrb[0].mxu0 %v1180
        %v1863 = vpop.f32.mrb[0].mxu0
        %v1864 = vadd.f32 %v1347, %v1863
        %v1865 = vpop.f32.mrb[0].mxu0
        %v1866 = vpop.f32.mrb[0].mxu0
        %v1867 = vadd.f32 %v1347, %v1866
        %v1868 = vpop.f32.mrb[0].mxu0
        %1869 = vmatprep.mubr.bf16.mxu0 %v1190
        %1870 = vmatmul.mubr.bf16.gmra.mrb[0].mxu0 %v1189
        %v1871 = vpop.f32.mrb[0].mxu0
        %v1872 = vadd.f32 %v1347, %v1871
        %v1873 = vpop.f32.mrb[0].mxu0
        %v1874 = vpop.f32.mrb[0].mxu0
        %v1875 = vadd.f32 %v1347, %v1874
        %v1876 = vpop.f32.mrb[0].mxu0
        %1877 = vdwg.mxu0
        %1878 = vmatprep.subr.bf16.mxu0 0
        %1879 = vmatpush1.bf16.msra.mxu0 %v1653
        %1880 = vmatprep.subr.bf16.mxu0 0
        %1881 = vmatpush1.bf16.msra.mxu0 %v1654
        %1882 = vmatprep.subr.bf16.mxu0 0
        %1883 = vmatpush1.bf16.msra.mxu0 %v1655
        %1884 = vmatprep.subr.bf16.mxu0 0
        %1885 = vmatpush1.bf16.msra.mxu0 %v1656
        %1886 = vmatprep.subr.bf16.mxu0 0
        %1887 = vmatpush1.bf16.msra.mxu0 %v1657
        %1888 = vmatprep.subr.bf16.mxu0 0
        %1889 = vmatpush1.bf16.msra.mxu0 %v1658
        %1890 = vmatprep.subr.bf16.mxu0 0
        %1891 = vmatpush1.bf16.msra.mxu0 %v1659
        %1892 = vmatprep.subr.bf16.mxu0 0
        %1893 = vmatpush1.bf16.msra.mxu0 %v1660
        %1894 = vmatprep.subr.bf16.mxu0 0
        %1895 = vmatpush1.bf16.msra.mxu0 %v1661
        %1896 = vmatprep.subr.bf16.mxu0 0
        %1897 = vmatpush1.bf16.msra.mxu0 %v1662
        %1898 = vmatprep.subr.bf16.mxu0 0
        %1899 = vmatpush1.bf16.msra.mxu0 %v1663
        %1900 = vmatprep.subr.bf16.mxu0 0
        %1901 = vmatpush1.bf16.msra.mxu0 %v1664
        %1902 = vmatprep.subr.bf16.mxu0 0
        %1903 = vmatpush1.bf16.msra.mxu0 %v1665
        %1904 = vmatprep.subr.bf16.mxu0 0
        %1905 = vmatpush1.bf16.msra.mxu0 %v1666
        %1906 = vmatprep.subr.bf16.mxu0 0
        %1907 = vmatpush1.bf16.msra.mxu0 %v1667
        %1908 = vmatprep.subr.bf16.mxu0 0
        %1909 = vmatpush1.bf16.msra.mxu0 %v1668
        %1910 = vmatprep.mubr.bf16.mxu0 %v1129
        %1911 = vmatmul.mubr.bf16.gmra.mrb[0].mxu0 %v1128
        %v1912 = vpop.f32.mrb[0].mxu0
        %v1913 = vadd.f32 %v1816, %v1912
        %v1914 = vpop.f32.mrb[0].mxu0
        %v1915 = vpop.f32.mrb[0].mxu0
        %v1916 = vadd.f32 %v1819, %v1915
        %v1917 = vpop.f32.mrb[0].mxu0
        %1918 = vmatprep.mubr.bf16.mxu0 %v1138
        %1919 = vmatmul.mubr.bf16.gmra.mrb[0].mxu0 %v1137
        %v1920 = vpop.f32.mrb[0].mxu0
        %v1921 = vadd.f32 %v1824, %v1920
        %v1922 = vpop.f32.mrb[0].mxu0
        %v1923 = vpop.f32.mrb[0].mxu0
        %v1924 = vadd.f32 %v1827, %v1923
        %v1925 = vpop.f32.mrb[0].mxu0
        %1926 = vmatprep.mubr.bf16.mxu0 %v1147
        %1927 = vmatmul.mubr.bf16.gmra.mrb[0].mxu0 %v1146
        %v1928 = vpop.f32.mrb[0].mxu0
        %v1929 = vadd.f32 %v1832, %v1928
        %v1930 = vpop.f32.mrb[0].mxu0
        %v1931 = vpop.f32.mrb[0].mxu0
        %v1932 = vadd.f32 %v1835, %v1931
        %v1933 = vpop.f32.mrb[0].mxu0
        %1934 = vmatprep.mubr.bf16.mxu0 %v1156
        %1935 = vmatmul.mubr.bf16.gmra.mrb[0].mxu0 %v1155
        %v1936 = vpop.f32.mrb[0].mxu0
        %v1937 = vadd.f32 %v1840, %v1936
        %v1938 = vpop.f32.mrb[0].mxu0
        %v1939 = vpop.f32.mrb[0].mxu0
        %v1940 = vadd.f32 %v1843, %v1939
        %v1941 = vpop.f32.mrb[0].mxu0
        %1942 = vmatprep.mubr.bf16.mxu0 %v1165
        %1943 = vmatmul.mubr.bf16.gmra.mrb[0].mxu0 %v1164
        %v1944 = vpop.f32.mrb[0].mxu0
        %v1945 = vadd.f32 %v1848, %v1944
        %v1946 = vpop.f32.mrb[0].mxu0
        %v1947 = vpop.f32.mrb[0].mxu0
        %v1948 = vadd.f32 %v1851, %v1947
        %v1949 = vpop.f32.mrb[0].mxu0
        %1950 = vmatprep.mubr.bf16.mxu0 %v1174
        %1951 = vmatmul.mubr.bf16.gmra.mrb[0].mxu0 %v1173
        %v1952 = vpop.f32.mrb[0].mxu0
        %v1953 = vadd.f32 %v1856, %v1952
        %v1954 = vpop.f32.mrb[0].mxu0
        %v1955 = vpop.f32.mrb[0].mxu0
        %v1956 = vadd.f32 %v1859, %v1955
        %v1957 = vpop.f32.mrb[0].mxu0
        %1958 = vmatprep.mubr.bf16.mxu0 %v1183
        %1959 = vmatmul.mubr.bf16.gmra.mrb[0].mxu0 %v1182
        %v1960 = vpop.f32.mrb[0].mxu0
        %v1961 = vadd.f32 %v1864, %v1960
        %v1962 = vpop.f32.mrb[0].mxu0
        %v1963 = vpop.f32.mrb[0].mxu0
        %v1964 = vadd.f32 %v1867, %v1963
        %v1965 = vpop.f32.mrb[0].mxu0
        %1966 = vmatprep.mubr.bf16.mxu0 %v1192
        %1967 = vmatmul.mubr.bf16.gmra.mrb[0].mxu0 %v1191
        %v1968 = vpop.f32.mrb[0].mxu0
        %v1969 = vadd.f32 %v1872, %v1968
        %v1970 = vpop.f32.mrb[0].mxu0
        %v1971 = vpop.f32.mrb[0].mxu0
        %v1972 = vadd.f32 %v1875, %v1971
        %v1973 = vpop.f32.mrb[0].mxu0
        %1974 = vdwg.mxu0
        %1975 = vmatprep.subr.bf16.mxu0 0
        %1976 = vmatpush1.bf16.msra.mxu0 %v1669
        %1977 = vmatprep.subr.bf16.mxu0 0
        %1978 = vmatpush1.bf16.msra.mxu0 %v1670
        %1979 = vmatprep.subr.bf16.mxu0 0
        %1980 = vmatpush1.bf16.msra.mxu0 %v1671
        %1981 = vmatprep.subr.bf16.mxu0 0
        %1982 = vmatpush1.bf16.msra.mxu0 %v1672
        %1983 = vmatprep.subr.bf16.mxu0 0
        %1984 = vmatpush1.bf16.msra.mxu0 %v1673
        %1985 = vmatprep.subr.bf16.mxu0 0
        %1986 = vmatpush1.bf16.msra.mxu0 %v1674
        %1987 = vmatprep.subr.bf16.mxu0 0
        %1988 = vmatpush1.bf16.msra.mxu0 %v1675
        %1989 = vmatprep.subr.bf16.mxu0 0
        %1990 = vmatpush1.bf16.msra.mxu0 %v1676
        %1991 = vmatprep.subr.bf16.mxu0 0
        %1992 = vmatpush1.bf16.msra.mxu0 %v1677
        %1993 = vmatprep.subr.bf16.mxu0 0
        %1994 = vmatpush1.bf16.msra.mxu0 %v1678
        %1995 = vmatprep.subr.bf16.mxu0 0
        %1996 = vmatpush1.bf16.msra.mxu0 %v1679
        %1997 = vmatprep.subr.bf16.mxu0 0
        %1998 = vmatpush1.bf16.msra.mxu0 %v1680
        %1999 = vmatprep.subr.bf16.mxu0 0
        %2000 = vmatpush1.bf16.msra.mxu0 %v1681
        %2001 = vmatprep.subr.bf16.mxu0 0
        %2002 = vmatpush1.bf16.msra.mxu0 %v1682
        %2003 = vmatprep.subr.bf16.mxu0 0
        %2004 = vmatpush1.bf16.msra.mxu0 %v1683
        %2005 = vmatprep.subr.bf16.mxu0 0
        %2006 = vmatpush1.bf16.msra.mxu0 %v1684
        %2007 = vmatprep.mubr.bf16.mxu0 %v1131
        %2008 = vmatmul.mubr.bf16.gmra.mrb[0].mxu0 %v1130
        %v2009 = vpop.f32.mrb[0].mxu0
        %v2010 = vadd.f32 %v1913, %v2009
        %v2011 = vpop.f32.mrb[0].mxu0
        %v2012 = vpop.f32.mrb[0].mxu0
        %v2013 = vadd.f32 %v1916, %v2012
        %v2014 = vpop.f32.mrb[0].mxu0
        %2015 = vmatprep.mubr.bf16.mxu0 %v1140
        %2016 = vmatmul.mubr.bf16.gmra.mrb[0].mxu0 %v1139
        %v2017 = vpop.f32.mrb[0].mxu0
        %v2018 = vadd.f32 %v1921, %v2017
        %v2019 = vpop.f32.mrb[0].mxu0
        %v2020 = vpop.f32.mrb[0].mxu0
        %v2021 = vadd.f32 %v1924, %v2020
        %v2022 = vpop.f32.mrb[0].mxu0
        %2023 = vmatprep.mubr.bf16.mxu0 %v1149
        %2024 = vmatmul.mubr.bf16.gmra.mrb[0].mxu0 %v1148
        %v2025 = vpop.f32.mrb[0].mxu0
        %v2026 = vadd.f32 %v1929, %v2025
        %v2027 = vpop.f32.mrb[0].mxu0
        %v2028 = vpop.f32.mrb[0].mxu0
        %v2029 = vadd.f32 %v1932, %v2028
        %v2030 = vpop.f32.mrb[0].mxu0
        %2031 = vmatprep.mubr.bf16.mxu0 %v1158
        %2032 = vmatmul.mubr.bf16.gmra.mrb[0].mxu0 %v1157
        %v2033 = vpop.f32.mrb[0].mxu0
        %v2034 = vadd.f32 %v1937, %v2033
        %v2035 = vpop.f32.mrb[0].mxu0
        %v2036 = vpop.f32.mrb[0].mxu0
        %v2037 = vadd.f32 %v1940, %v2036
        %v2038 = vpop.f32.mrb[0].mxu0
        %2039 = vmatprep.mubr.bf16.mxu0 %v1167
        %2040 = vmatmul.mubr.bf16.gmra.mrb[0].mxu0 %v1166
        %v2041 = vpop.f32.mrb[0].mxu0
        %v2042 = vadd.f32 %v1945, %v2041
        %v2043 = vpop.f32.mrb[0].mxu0
        %v2044 = vpop.f32.mrb[0].mxu0
        %v2045 = vadd.f32 %v1948, %v2044
        %v2046 = vpop.f32.mrb[0].mxu0
        %2047 = vmatprep.mubr.bf16.mxu0 %v1176
        %2048 = vmatmul.mubr.bf16.gmra.mrb[0].mxu0 %v1175
        %v2049 = vpop.f32.mrb[0].mxu0
        %v2050 = vadd.f32 %v1953, %v2049
        %v2051 = vpop.f32.mrb[0].mxu0
        %v2052 = vpop.f32.mrb[0].mxu0
        %v2053 = vadd.f32 %v1956, %v2052
        %v2054 = vpop.f32.mrb[0].mxu0
        %2055 = vmatprep.mubr.bf16.mxu0 %v1185
        %2056 = vmatmul.mubr.bf16.gmra.mrb[0].mxu0 %v1184
        %v2057 = vpop.f32.mrb[0].mxu0
        %v2058 = vadd.f32 %v1961, %v2057
        %v2059 = vpop.f32.mrb[0].mxu0
        %v2060 = vpop.f32.mrb[0].mxu0
        %v2061 = vadd.f32 %v1964, %v2060
        %v2062 = vpop.f32.mrb[0].mxu0
        %2063 = vmatprep.mubr.bf16.mxu0 %v1194
        %2064 = vmatmul.mubr.bf16.gmra.mrb[0].mxu0 %v1193
        %v2065 = vpop.f32.mrb[0].mxu0
        %v2066 = vadd.f32 %v1969, %v2065
        %v2067 = vpop.f32.mrb[0].mxu0
        %v2068 = vpop.f32.mrb[0].mxu0
        %v2069 = vadd.f32 %v1972, %v2068
        %v2070 = vpop.f32.mrb[0].mxu0
        %2071 = vdwg.mxu0
        %2072 = vmatprep.subr.bf16.mxu0 0
        %2073 = vmatpush1.bf16.msra.mxu0 %v1685
        %2074 = vmatprep.subr.bf16.mxu0 0
        %2075 = vmatpush1.bf16.msra.mxu0 %v1686
        %2076 = vmatprep.subr.bf16.mxu0 0
        %2077 = vmatpush1.bf16.msra.mxu0 %v1687
        %2078 = vmatprep.subr.bf16.mxu0 0
        %2079 = vmatpush1.bf16.msra.mxu0 %v1688
        %2080 = vmatprep.subr.bf16.mxu0 0
        %2081 = vmatpush1.bf16.msra.mxu0 %v1689
        %2082 = vmatprep.subr.bf16.mxu0 0
        %2083 = vmatpush1.bf16.msra.mxu0 %v1690
        %2084 = vmatprep.subr.bf16.mxu0 0
        %2085 = vmatpush1.bf16.msra.mxu0 %v1691
        %2086 = vmatprep.subr.bf16.mxu0 0
        %2087 = vmatpush1.bf16.msra.mxu0 %v1692
        %2088 = vmatprep.subr.bf16.mxu0 0
        %2089 = vmatpush1.bf16.msra.mxu0 %v1693
        %2090 = vmatprep.subr.bf16.mxu0 0
        %2091 = vmatpush1.bf16.msra.mxu0 %v1694
        %2092 = vmatprep.subr.bf16.mxu0 0
        %2093 = vmatpush1.bf16.msra.mxu0 %v1695
        %2094 = vmatprep.subr.bf16.mxu0 0
        %2095 = vmatpush1.bf16.msra.mxu0 %v1696
        %2096 = vmatprep.subr.bf16.mxu0 0
        %2097 = vmatpush1.bf16.msra.mxu0 %v1697
        %2098 = vmatprep.subr.bf16.mxu0 0
        %2099 = vmatpush1.bf16.msra.mxu0 %v1698
        %2100 = vmatprep.subr.bf16.mxu0 0
        %2101 = vmatpush1.bf16.msra.mxu0 %v1699
        %2102 = vmatprep.subr.bf16.mxu0 0
        %2103 = vmatpush1.bf16.msra.mxu0 %v1700
        %2104 = vmatprep.mubr.bf16.mxu0 %v1133
        %2105 = vmatmul.mubr.bf16.gmra.mrb[0].mxu0 %v1132
        %v2106 = vpop.f32.mrb[0].mxu0
        %v2107 = vadd.f32 %v2010, %v2106
        %v2108 = vpop.f32.mrb[0].mxu0
        %v2109 = vpop.f32.mrb[0].mxu0
        %v2110 = vadd.f32 %v2013, %v2109
        %v2111 = vpop.f32.mrb[0].mxu0
        %2112 = vmatprep.mubr.bf16.mxu0 %v1142
        %2113 = vmatmul.mubr.bf16.gmra.mrb[0].mxu0 %v1141
        %v2114 = vpop.f32.mrb[0].mxu0
        %v2115 = vadd.f32 %v2018, %v2114
        %v2116 = vpop.f32.mrb[0].mxu0
        %v2117 = vpop.f32.mrb[0].mxu0
        %v2118 = vadd.f32 %v2021, %v2117
        %v2119 = vpop.f32.mrb[0].mxu0
        %2120 = vmatprep.mubr.bf16.mxu0 %v1151
        %2121 = vmatmul.mubr.bf16.gmra.mrb[0].mxu0 %v1150
        %v2122 = vpop.f32.mrb[0].mxu0
        %v2123 = vadd.f32 %v2026, %v2122
        %v2124 = vpop.f32.mrb[0].mxu0
        %v2125 = vpop.f32.mrb[0].mxu0
        %v2126 = vadd.f32 %v2029, %v2125
        %v2127 = vpop.f32.mrb[0].mxu0
        %2128 = vmatprep.mubr.bf16.mxu0 %v1160
        %2129 = vmatmul.mubr.bf16.gmra.mrb[0].mxu0 %v1159
        %v2130 = vpop.f32.mrb[0].mxu0
        %v2131 = vadd.f32 %v2034, %v2130
        %v2132 = vpop.f32.mrb[0].mxu0
        %v2133 = vpop.f32.mrb[0].mxu0
        %v2134 = vadd.f32 %v2037, %v2133
        %v2135 = vpop.f32.mrb[0].mxu0
        %2136 = vmatprep.mubr.bf16.mxu0 %v1169
        %2137 = vmatmul.mubr.bf16.gmra.mrb[0].mxu0 %v1168
        %v2138 = vpop.f32.mrb[0].mxu0
        %v2139 = vadd.f32 %v2042, %v2138
        %v2140 = vpop.f32.mrb[0].mxu0
        %v2141 = vpop.f32.mrb[0].mxu0
        %v2142 = vadd.f32 %v2045, %v2141
        %v2143 = vpop.f32.mrb[0].mxu0
        %2144 = vmatprep.mubr.bf16.mxu0 %v1178
        %2145 = vmatmul.mubr.bf16.gmra.mrb[0].mxu0 %v1177
        %v2146 = vpop.f32.mrb[0].mxu0
        %v2147 = vadd.f32 %v2050, %v2146
        %v2148 = vpop.f32.mrb[0].mxu0
        %v2149 = vpop.f32.mrb[0].mxu0
        %v2150 = vadd.f32 %v2053, %v2149
        %v2151 = vpop.f32.mrb[0].mxu0
        %2152 = vmatprep.mubr.bf16.mxu0 %v1187
        %2153 = vmatmul.mubr.bf16.gmra.mrb[0].mxu0 %v1186
        %v2154 = vpop.f32.mrb[0].mxu0
        %v2155 = vadd.f32 %v2058, %v2154
        %v2156 = vpop.f32.mrb[0].mxu0
        %v2157 = vpop.f32.mrb[0].mxu0
        %v2158 = vadd.f32 %v2061, %v2157
        %v2159 = vpop.f32.mrb[0].mxu0
        %2160 = vmatprep.mubr.bf16.mxu0 %v1196
        %2161 = vmatmul.mubr.bf16.gmra.mrb[0].mxu0 %v1195
        %v2162 = vpop.f32.mrb[0].mxu0
        %v2163 = vadd.f32 %v2066, %v2162
        %v2164 = vpop.f32.mrb[0].mxu0
        %v2165 = vpop.f32.mrb[0].mxu0
        %v2166 = vadd.f32 %v2069, %v2165
        %v2167 = vpop.f32.mrb[0].mxu0
        %2168 = vdwg.mxu0
        %2169 = vmatprep.subr.bf16.mxu0 0
        %2170 = vmatpush1.bf16.msra.mxu0 %v1701
        %2171 = vmatprep.subr.bf16.mxu0 0
        %2172 = vmatpush1.bf16.msra.mxu0 %v1702
        %2173 = vmatprep.subr.bf16.mxu0 0
        %2174 = vmatpush1.bf16.msra.mxu0 %v1703
        %2175 = vmatprep.subr.bf16.mxu0 0
        %2176 = vmatpush1.bf16.msra.mxu0 %v1704
        %2177 = vmatprep.subr.bf16.mxu0 0
        %2178 = vmatpush1.bf16.msra.mxu0 %v1705
        %2179 = vmatprep.subr.bf16.mxu0 0
        %2180 = vmatpush1.bf16.msra.mxu0 %v1706
        %2181 = vmatprep.subr.bf16.mxu0 0
        %2182 = vmatpush1.bf16.msra.mxu0 %v1707
        %2183 = vmatprep.subr.bf16.mxu0 0
        %2184 = vmatpush1.bf16.msra.mxu0 %v1708
        %2185 = vmatprep.subr.bf16.mxu0 0
        %2186 = vmatpush1.bf16.msra.mxu0 0
        %2187 = vmatprep.subr.bf16.mxu0 0
        %2188 = vmatpush1.bf16.msra.mxu0 0
        %2189 = vmatprep.subr.bf16.mxu0 0
        %2190 = vmatpush1.bf16.msra.mxu0 0
        %2191 = vmatprep.subr.bf16.mxu0 0
        %2192 = vmatpush1.bf16.msra.mxu0 0
        %2193 = vmatprep.subr.bf16.mxu0 0
        %2194 = vmatpush1.bf16.msra.mxu0 0
        %2195 = vmatprep.subr.bf16.mxu0 0
        %2196 = vmatpush1.bf16.msra.mxu0 0
        %2197 = vmatprep.subr.bf16.mxu0 0
        %2198 = vmatpush1.bf16.msra.mxu0 0
        %2199 = vmatprep.subr.bf16.mxu0 0
        %2200 = vmatpush1.bf16.msra.mxu0 0
        %2201 = vmatprep.mubr.bf16.mxu0 0
        %2202 = vmatmul.mubr.bf16.gmra.mrb[0].mxu0 %v1134
        %v2203 = vpop.f32.mrb[0].mxu0
        %v2204 = vadd.f32 %v2107, %v2203
        %v2205 = vpop.f32.mrb[0].mxu0
        %v2206 = vpop.f32.mrb[0].mxu0
        %v2207 = vadd.f32 %v2110, %v2206
        %v2208 = vpop.f32.mrb[0].mxu0
        %2209 = vmatprep.mubr.bf16.mxu0 0
        %2210 = vmatmul.mubr.bf16.gmra.mrb[0].mxu0 %v1143
        %v2211 = vpop.f32.mrb[0].mxu0
        %v2212 = vadd.f32 %v2115, %v2211
        %v2213 = vpop.f32.mrb[0].mxu0
        %v2214 = vpop.f32.mrb[0].mxu0
        %v2215 = vadd.f32 %v2118, %v2214
        %v2216 = vpop.f32.mrb[0].mxu0
        %2217 = vmatprep.mubr.bf16.mxu0 0
        %2218 = vmatmul.mubr.bf16.gmra.mrb[0].mxu0 %v1152
        %v2219 = vpop.f32.mrb[0].mxu0
        %v2220 = vadd.f32 %v2123, %v2219
        %v2221 = vpop.f32.mrb[0].mxu0
        %v2222 = vpop.f32.mrb[0].mxu0
        %v2223 = vadd.f32 %v2126, %v2222
        %v2224 = vpop.f32.mrb[0].mxu0
        %2225 = vmatprep.mubr.bf16.mxu0 0
        %2226 = vmatmul.mubr.bf16.gmra.mrb[0].mxu0 %v1161
        %v2227 = vpop.f32.mrb[0].mxu0
        %v2228 = vadd.f32 %v2131, %v2227
        %v2229 = vpop.f32.mrb[0].mxu0
        %v2230 = vpop.f32.mrb[0].mxu0
        %v2231 = vadd.f32 %v2134, %v2230
        %v2232 = vpop.f32.mrb[0].mxu0
        %2233 = vmatprep.mubr.bf16.mxu0 0
        %2234 = vmatmul.mubr.bf16.gmra.mrb[0].mxu0 %v1170
        %v2235 = vpop.f32.mrb[0].mxu0
        %v2236 = vadd.f32 %v2139, %v2235
        %v2237 = vpop.f32.mrb[0].mxu0
        %v2238 = vpop.f32.mrb[0].mxu0
        %v2239 = vadd.f32 %v2142, %v2238
        %v2240 = vpop.f32.mrb[0].mxu0
        %2241 = vmatprep.mubr.bf16.mxu0 0
        %2242 = vmatmul.mubr.bf16.gmra.mrb[0].mxu0 %v1179
        %v2243 = vpop.f32.mrb[0].mxu0
        %v2244 = vadd.f32 %v2147, %v2243
        %v2245 = vpop.f32.mrb[0].mxu0
        %v2246 = vpop.f32.mrb[0].mxu0
        %v2247 = vadd.f32 %v2150, %v2246
        %v2248 = vpop.f32.mrb[0].mxu0
        %2249 = vmatprep.mubr.bf16.mxu0 0
        %2250 = vmatmul.mubr.bf16.gmra.mrb[0].mxu0 %v1188
        %v2251 = vpop.f32.mrb[0].mxu0
        %v2252 = vadd.f32 %v2155, %v2251
        %v2253 = vpop.f32.mrb[0].mxu0
        %v2254 = vpop.f32.mrb[0].mxu0
        %v2255 = vadd.f32 %v2158, %v2254
        %v2256 = vpop.f32.mrb[0].mxu0
        %2257 = vmatprep.mubr.bf16.mxu0 0
        %2258 = vmatmul.mubr.bf16.gmra.mrb[0].mxu0 %v1197
        %v2259 = vpop.f32.mrb[0].mxu0
        %v2260 = vadd.f32 %v2163, %v2259
        %v2261 = vpop.f32.mrb[0].mxu0
        %v2262 = vpop.f32.mrb[0].mxu0
        %v2263 = vadd.f32 %v2166, %v2262
        %v2264 = vpop.f32.mrb[0].mxu0
        %2265 = vdwg.mxu0
        %v2266 = vmax.f32 %v2204, 0.0
        %v2267 = vmax.f32 %v2207, 0.0
        %v2268 = vmax.f32 %v2212, 0.0
        %v2269 = vmax.f32 %v2215, 0.0
        %v2270 = vmax.f32 %v2220, 0.0
        %v2271 = vmax.f32 %v2223, 0.0
        %v2272 = vmax.f32 %v2228, 0.0
        %v2273 = vmax.f32 %v2231, 0.0
        %v2274 = vmax.f32 %v2236, 0.0
        %v2275 = vmax.f32 %v2239, 0.0
        %v2276 = vmax.f32 %v2244, 0.0
        %v2277 = vmax.f32 %v2247, 0.0
        %v2278 = vmax.f32 %v2252, 0.0
        %v2279 = vmax.f32 %v2255, 0.0
        %v2280 = vmax.f32 %v2260, 0.0
        %v2281 = vmax.f32 %v2263, 0.0
        %v2282 = vpack.c.bf16 %v2267, %v2266
        %v2283 = vpack.c.bf16 %v2269, %v2268
        %v2284 = vpack.c.bf16 %v2271, %v2270
        %v2285 = vpack.c.bf16 %v2273, %v2272
        %v2286 = vpack.c.bf16 %v2275, %v2274
        %v2287 = vpack.c.bf16 %v2277, %v2276
        %v2288 = vpack.c.bf16 %v2279, %v2278
        %v2289 = vpack.c.bf16 %v2281, %v2280
        %v2290 = vld [vmem:[#allocation10] sm:$0xf]
        %v2291 = vld [vmem:[#allocation10 + $0x4] sm:$0xf]
        %v2292 = vld [vmem:[#allocation10 + $0x8] sm:$0xf]
        %v2293 = vld [vmem:[#allocation10 + $0xc] sm:$0xf]
        %v2294 = vld [vmem:[#allocation10 + $0x10] sm:$0xf]
        %v2295 = vld [vmem:[#allocation10 + $0x14] sm:$0xf]
        %v2296 = vld [vmem:[#allocation10 + $0x18] sm:$0xf]
        %v2297 = vld [vmem:[#allocation10 + $0x1c] sm:$0xf]
        %v2298 = vld [vmem:[#allocation10 + $0x20] sm:$0xf]
        %v2299 = vld [vmem:[#allocation10 + $0x24] sm:$0xf]
        %v2300 = vld [vmem:[#allocation10 + $0x28] sm:$0xf]
        %v2301 = vld [vmem:[#allocation10 + $0x2c] sm:$0xf]
        %v2302 = vld [vmem:[#allocation10 + $0x30] sm:$0xf]
        %v2303 = vld [vmem:[#allocation10 + $0x34] sm:$0xf]
        %v2304 = vld [vmem:[#allocation10 + $0x38] sm:$0xf]
        %v2305 = vld [vmem:[#allocation10 + $0x3c] sm:$0xf]
        %v2306 = vld [vmem:[%s6] sm:$0x1]
        %v2308 = vlaneseq
        %v2309 = vshrl.u32 %v2308, 7
        %v2310 = vsub.s32 0, %v2309
        %v2311 = vrot.slane %v2306, %v2310
        %v2329 = vunpack.c.l.b16 %v2290
        %v2330 = vunpack.c.l.b16 %v2291
        %v2331 = vunpack.c.l.b16 %v2292
        %v2332 = vunpack.c.l.b16 %v2293
        %v2333 = vunpack.c.l.b16 %v2294
        %v2334 = vunpack.c.l.b16 %v2295
        %v2335 = vunpack.c.l.b16 %v2296
        %v2336 = vunpack.c.l.b16 %v2297
        %v2337 = vunpack.c.l.b16 %v2298
        %v2338 = vunpack.c.l.b16 %v2299
        %v2339 = vunpack.c.l.b16 %v2300
        %v2340 = vunpack.c.l.b16 %v2301
        %v2341 = vunpack.c.l.b16 %v2302
        %v2342 = vunpack.c.l.b16 %v2303
        %v2343 = vunpack.c.l.b16 %v2304
        %v2344 = vunpack.c.l.b16 %v2305
        %v2345 = vpack.c.b16 %v2330, %v2329
        %v2346 = vpack.c.b16 %v2332, %v2331
        %v2347 = vpack.c.b16 %v2334, %v2333
        %v2348 = vpack.c.b16 %v2336, %v2335
        %v2349 = vpack.c.b16 %v2338, %v2337
        %v2350 = vpack.c.b16 %v2340, %v2339
        %v2351 = vpack.c.b16 %v2342, %v2341
        %v2352 = vpack.c.b16 %v2344, %v2343
        %2361 = vmatprep.subr.bf16.mxu0 0
        %2362 = vmatpush1.bf16.msra.mxu0 %v2345
        %2363 = vmatprep.subr.bf16.mxu0 0
        %2364 = vmatpush1.bf16.msra.mxu0 %v2346
        %2365 = vmatprep.subr.bf16.mxu0 0
        %2366 = vmatpush1.bf16.msra.mxu0 %v2347
        %2367 = vmatprep.subr.bf16.mxu0 0
        %2368 = vmatpush1.bf16.msra.mxu0 %v2348
        %2369 = vmatprep.subr.bf16.mxu0 0
        %2370 = vmatpush1.bf16.msra.mxu0 %v2349
        %2371 = vmatprep.subr.bf16.mxu0 0
        %2372 = vmatpush1.bf16.msra.mxu0 %v2350
        %2373 = vmatprep.subr.bf16.mxu0 0
        %2374 = vmatpush1.bf16.msra.mxu0 %v2351
        %2375 = vmatprep.subr.bf16.mxu0 0
        %2376 = vmatpush1.bf16.msra.mxu0 %v2352
        %2377 = vmatprep.subr.bf16.mxu0 0
        %2378 = vmatpush1.bf16.msra.mxu0 0
        %2379 = vmatprep.subr.bf16.mxu0 0
        %2380 = vmatpush1.bf16.msra.mxu0 0
        %2381 = vmatprep.subr.bf16.mxu0 0
        %2382 = vmatpush1.bf16.msra.mxu0 0
        %2383 = vmatprep.subr.bf16.mxu0 0
        %2384 = vmatpush1.bf16.msra.mxu0 0
        %2385 = vmatprep.subr.bf16.mxu0 0
        %2386 = vmatpush1.bf16.msra.mxu0 0
        %2387 = vmatprep.subr.bf16.mxu0 0
        %2388 = vmatpush1.bf16.msra.mxu0 0
        %2389 = vmatprep.subr.bf16.mxu0 0
        %2390 = vmatpush1.bf16.msra.mxu0 0
        %2391 = vmatprep.subr.bf16.mxu0 0
        %2392 = vmatpush1.bf16.msra.mxu0 0
        %2393 = vmatprep.mubr.bf16.mxu0 0
        %2394 = vmatmul.mubr.bf16.gmra.mrb[0].mxu0 %v2282
        %v2395 = vpop.f32.mrb[0].mxu0
        %v2396 = vadd.f32 %v2311, %v2395
        %v2397 = vpop.f32.mrb[0].mxu0
        %v2398 = vpop.f32.mrb[0].mxu0
        %v2399 = vadd.f32 %v2311, %v2398
        %v2400 = vpop.f32.mrb[0].mxu0
        %2401 = vmatprep.mubr.bf16.mxu0 0
        %2402 = vmatmul.mubr.bf16.gmra.mrb[0].mxu0 %v2283
        %v2403 = vpop.f32.mrb[0].mxu0
        %v2404 = vadd.f32 %v2311, %v2403
        %v2405 = vpop.f32.mrb[0].mxu0
        %v2406 = vpop.f32.mrb[0].mxu0
        %v2407 = vadd.f32 %v2311, %v2406
        %v2408 = vpop.f32.mrb[0].mxu0
        %2409 = vmatprep.mubr.bf16.mxu0 0
        %2410 = vmatmul.mubr.bf16.gmra.mrb[0].mxu0 %v2284
        %v2411 = vpop.f32.mrb[0].mxu0
        %v2412 = vadd.f32 %v2311, %v2411
        %v2413 = vpop.f32.mrb[0].mxu0
        %v2414 = vpop.f32.mrb[0].mxu0
        %v2415 = vadd.f32 %v2311, %v2414
        %v2416 = vpop.f32.mrb[0].mxu0
        %2417 = vmatprep.mubr.bf16.mxu0 0
        %2418 = vmatmul.mubr.bf16.gmra.mrb[0].mxu0 %v2285
        %v2419 = vpop.f32.mrb[0].mxu0
        %v2420 = vadd.f32 %v2311, %v2419
        %v2421 = vpop.f32.mrb[0].mxu0
        %v2422 = vpop.f32.mrb[0].mxu0
        %v2423 = vadd.f32 %v2311, %v2422
        %v2424 = vpop.f32.mrb[0].mxu0
        %2425 = vmatprep.mubr.bf16.mxu0 0
        %2426 = vmatmul.mubr.bf16.gmra.mrb[0].mxu0 %v2286
        %v2427 = vpop.f32.mrb[0].mxu0
        %v2428 = vadd.f32 %v2311, %v2427
        %v2429 = vpop.f32.mrb[0].mxu0
        %v2430 = vpop.f32.mrb[0].mxu0
        %v2431 = vadd.f32 %v2311, %v2430
        %v2432 = vpop.f32.mrb[0].mxu0
        %2433 = vmatprep.mubr.bf16.mxu0 0
        %2434 = vmatmul.mubr.bf16.gmra.mrb[0].mxu0 %v2287
        %v2435 = vpop.f32.mrb[0].mxu0
        %v2436 = vadd.f32 %v2311, %v2435
        %v2437 = vpop.f32.mrb[0].mxu0
        %v2438 = vpop.f32.mrb[0].mxu0
        %v2439 = vadd.f32 %v2311, %v2438
        %v2440 = vpop.f32.mrb[0].mxu0
        %2441 = vmatprep.mubr.bf16.mxu0 0
        %2442 = vmatmul.mubr.bf16.gmra.mrb[0].mxu0 %v2288
        %v2443 = vpop.f32.mrb[0].mxu0
        %v2444 = vadd.f32 %v2311, %v2443
        %v2445 = vpop.f32.mrb[0].mxu0
        %v2446 = vpop.f32.mrb[0].mxu0
        %v2447 = vadd.f32 %v2311, %v2446
        %v2448 = vpop.f32.mrb[0].mxu0
        %2449 = vmatprep.mubr.bf16.mxu0 0
        %2450 = vmatmul.mubr.bf16.gmra.mrb[0].mxu0 %v2289
        %v2451 = vpop.f32.mrb[0].mxu0
        %v2452 = vadd.f32 %v2311, %v2451
        %v2453 = vpop.f32.mrb[0].mxu0
        %v2454 = vpop.f32.mrb[0].mxu0
        %v2455 = vadd.f32 %v2311, %v2454
        %v2456 = vpop.f32.mrb[0].mxu0
        %2457 = vdwg.mxu0
        %s2458 = smul.u32 %s829, 2
        %s2459 = smul.addr %s2458, 4
        %s2460 = scalar_lea.vmem %s312, %s2459 [#allocation4]
        %v2461 = vld [vmem:[%s2460] sm:$0xf]
        %v2462 = vld [vmem:[%s2460 + $0x4] sm:$0xf]
        %v2463 = vld [vmem:[%s2460 + $0x8] sm:$0xf]
        %v2464 = vld [vmem:[%s2460 + $0xc] sm:$0xf]
        %v2465 = vld [vmem:[%s2460 + $0x10] sm:$0xf]
        %v2466 = vld [vmem:[%s2460 + $0x14] sm:$0xf]
        %v2467 = vld [vmem:[%s2460 + $0x18] sm:$0xf]
        %v2468 = vld [vmem:[%s2460 + $0x1c] sm:$0xf]
        %v2469 = vld [vmem:[%s2460 + $0x20] sm:$0xf]
        %v2470 = vld [vmem:[%s2460 + $0x24] sm:$0xf]
        %v2471 = vld [vmem:[%s2460 + $0x28] sm:$0xf]
        %v2472 = vld [vmem:[%s2460 + $0x2c] sm:$0xf]
        %v2473 = vld [vmem:[%s2460 + $0x30] sm:$0xf]
        %v2474 = vld [vmem:[%s2460 + $0x34] sm:$0xf]
        %v2475 = vld [vmem:[%s2460 + $0x38] sm:$0xf]
        %v2476 = vld [vmem:[%s2460 + $0x3c] sm:$0xf]
        %v2477 = vunpack.c.l.bf16 %v2461
        %v2478 = vunpack.c.l.bf16 %v2462
        %v2479 = vunpack.c.l.bf16 %v2463
        %v2480 = vunpack.c.l.bf16 %v2464
        %v2481 = vunpack.c.l.bf16 %v2465
        %v2482 = vunpack.c.l.bf16 %v2466
        %v2483 = vunpack.c.l.bf16 %v2467
        %v2484 = vunpack.c.l.bf16 %v2468
        %v2485 = vunpack.c.l.bf16 %v2469
        %v2486 = vunpack.c.l.bf16 %v2470
        %v2487 = vunpack.c.l.bf16 %v2471
        %v2488 = vunpack.c.l.bf16 %v2472
        %v2489 = vunpack.c.l.bf16 %v2473
        %v2490 = vunpack.c.l.bf16 %v2474
        %v2491 = vunpack.c.l.bf16 %v2475
        %v2492 = vunpack.c.l.bf16 %v2476
        %v2493 = vadd.f32 %v2396, %v2477
        %v2494 = vadd.f32 %v2399, %v2478
        %v2495 = vadd.f32 %v2404, %v2479
        %v2496 = vadd.f32 %v2407, %v2480
        %v2497 = vadd.f32 %v2412, %v2481
        %v2498 = vadd.f32 %v2415, %v2482
        %v2499 = vadd.f32 %v2420, %v2483
        %v2500 = vadd.f32 %v2423, %v2484
        %v2501 = vadd.f32 %v2428, %v2485
        %v2502 = vadd.f32 %v2431, %v2486
        %v2503 = vadd.f32 %v2436, %v2487
        %v2504 = vadd.f32 %v2439, %v2488
        %v2505 = vadd.f32 %v2444, %v2489
        %v2506 = vadd.f32 %v2447, %v2490
        %v2507 = vadd.f32 %v2452, %v2491
        %v2508 = vadd.f32 %v2455, %v2492
        %v2509 = vmax.f32 %v2493, 0.0
        %v2510 = vmax.f32 %v2494, 0.0
        %v2511 = vmax.f32 %v2495, 0.0
        %v2512 = vmax.f32 %v2496, 0.0
        %v2513 = vmax.f32 %v2497, 0.0
        %v2514 = vmax.f32 %v2498, 0.0
        %v2515 = vmax.f32 %v2499, 0.0
        %v2516 = vmax.f32 %v2500, 0.0
        %v2517 = vmax.f32 %v2501, 0.0
        %v2518 = vmax.f32 %v2502, 0.0
        %v2519 = vmax.f32 %v2503, 0.0
        %v2520 = vmax.f32 %v2504, 0.0
        %v2521 = vmax.f32 %v2505, 0.0
        %v2522 = vmax.f32 %v2506, 0.0
        %v2523 = vmax.f32 %v2507, 0.0
        %v2524 = vmax.f32 %v2508, 0.0
        %2525 = vst [vmem:[%s354] sm:$0xff] %v2509
        %2526 = vst [vmem:[%s354 + $0x8] sm:$0xff] %v2510
        %2527 = vst [vmem:[%s354 + $0x10] sm:$0xff] %v2511
        %2528 = vst [vmem:[%s354 + $0x18] sm:$0xff] %v2512
        %2529 = vst [vmem:[%s354 + $0x20] sm:$0xff] %v2513
        %2530 = vst [vmem:[%s354 + $0x28] sm:$0xff] %v2514
        %2531 = vst [vmem:[%s354 + $0x30] sm:$0xff] %v2515
        %2532 = vst [vmem:[%s354 + $0x38] sm:$0xff] %v2516
        %2533 = vst [vmem:[%s354 + $0x40] sm:$0xff] %v2517
        %2534 = vst [vmem:[%s354 + $0x48] sm:$0xff] %v2518
        %2535 = vst [vmem:[%s354 + $0x50] sm:$0xff] %v2519
        %2536 = vst [vmem:[%s354 + $0x58] sm:$0xff] %v2520
        %2537 = vst [vmem:[%s354 + $0x60] sm:$0xff] %v2521
        %2538 = vst [vmem:[%s354 + $0x68] sm:$0xff] %v2522
        %2539 = vst [vmem:[%s354 + $0x70] sm:$0xff] %v2523
        %2540 = vst [vmem:[%s354 + $0x78] sm:$0xff] %v2524
        %s2541 = sand.u32 %s200, 1
        %s2542 = scalar_lea.sflag [#allocation6], %s2541
        %s2543 = sand.u32 %s200, 1
        %s2544 = smul.addr %s2543, 128
        %s2545 = scalar_lea.vmem [#allocation12], %s2544
        // Predicated region
        $region69: #{tpu_custom_call.1} parent=47 // pred_check
          %p2546 = pneg %p210
        $region70: #{tpu_custom_call.1} parent=47 // pred_check_branch
          %2548 = sbr.rel (%p2546) target = $region72
        $region71: #{tpu_custom_call.1} parent=47 // pred_region
          %s2549 = smul.u32 8, %s31
          %s2551 = ssub.s32 2048, 2048
          %2552 = vsyncadd %s2542, %s2551
          %s2553 = smul.addr %s2549, 2
          %s2554 = smul.addr %s30, 32
          %s2555 = sadd.s32 %s2553, %s2554
          %s2556 = smul.addr %s2555, 128
          %s2557 = scalar_lea.hbm %s7, %s2556
          %s2558 = sshll.u32 %s2545, 4
          %s2559 = int_to_ptr.vmem [resolvable:$true] %s2558
          %2564 = dma.vmem_to_hbm [thread:$0]  %s2559, 2048, %s2557, %s2542, 128, 128, 8
        $region72: #{tpu_custom_call.1} parent=47 // pred_fallthru
          _
      $region48: #{tpu_custom_call.1} parent=5 // pred_fallthru
        _
      %p2565 = scmp.le.s32.totalorder 2, %s21
      // Predicated region
      $region73: #{tpu_custom_call.1} parent=5 // pred_check
        %p2566 = pneg %p2565
      $region74: #{tpu_custom_call.1} parent=5 // pred_check_branch
        %2568 = sbr.rel (%p2566) target = $region76
      $region75: #{tpu_custom_call.1} parent=5 // pred_region
        %s2569 = ssub.s32 %s21, 2
        // Predicated region
        $region77: #{tpu_custom_call.1} parent=75 // pred_check
          %p2570 = pneg %p216
        $region78: #{tpu_custom_call.1} parent=75 // pred_check_branch
          %2572 = sbr.rel (%p2570) target = $region80
        $region79: #{tpu_custom_call.1} parent=75 // pred_region
          %s2573 = sand.u32 %s201, 1
          %s2574 = scalar_lea.sflag [#allocation6], %s2573
          %s2575 = sand.u32 %s201, 1
          %s2576 = smul.addr %s2575, 128
          %s2577 = scalar_lea.vmem [#allocation12], %s2576
          %2578 = dma.done %s2574, 2048
        $region80: #{tpu_custom_call.1} parent=75 // pred_fallthru
          _
      $region76: #{tpu_custom_call.1} parent=5 // pred_fallthru
        _
    $region6: #{tpu_custom_call.1} parent=1 // loop_footer
      %s25 = sadd.s32 1, %s21
    $region7: #{tpu_custom_call.1} parent=1 // loop_footer_branch
      %20 = sbr.rel target = $region3
    $region8: #{tpu_custom_call.1} parent=1 // loop_exit
      _
    %2579 = vsyncpa [#allocation5], 1
    %s2580 = scalar_lea.sflag [#allocation5], 1
    %2581 = vsyncpa %s2580, 1
    %2582 = vsyncpa [#allocation8], 1
    %2583 = vsyncpa [#allocation11], 1
    %2584 = vsyncpa [#allocation6], 1
    %s2585 = scalar_lea.sflag [#allocation6], 1
    %2586 = vsyncpa %s2585, 1

</llo_original>
